<compile_context>
chip_gen: v5e
topology: v5e:2x2
jax: 0.10.0
libtpu: 0.0.40
codegen_flags: <defaults>
</compile_context>

<pallas_src>
import functools

import jax
import jax.numpy as jnp
from jax.experimental import pallas as pl
from jax.experimental.pallas import tpu as pltpu


def _refinement_kernel(x_ref, w_in_ref, b_in_ref, wd_ref, bd_ref, w1_ref, b1_ref,
                       w_out_ref, b_out_ref, o_ref, stacked_ref, *, num_layers):
    # x_ref block: (1, D, T) bf16 -> work on (D, T); channels on sublanes, time on lanes.
    x = x_ref[0]
    F = w_in_ref.shape[0]
    T = x.shape[1]

    # input 1x1 conv: (F, D) @ (D, T) + (F, 1)   -- bf16 matmul, f32 accumulate
    out = (jnp.dot(w_in_ref[...], x, preferred_element_type=jnp.float32)
           + b_in_ref[...])                                                       # (F, T) f32

    # Dilated residual layers.  Static Python loop keeps the roll shifts static
    # (cheap static XLU rotates); the (3F, T) tap slab is a reused bf16 VMEM scratch,
    # so the unrolled layers do not stack up live f32 temporaries.
    for i in range(num_layers):
        d = 2 ** i
        # k=3 dilated "same" conv taps: x[t-d], x[t], x[t+d].
        # roll convention: roll(v, s)[t] = v[(t - s) mod T]; the d wrap-around columns
        # are zeroed with narrow strip stores (no full-tile selects, no iota).
        xm = pltpu.roll(out, shift=d, axis=1)                                      # x[t-d] (+wrap)
        stacked_ref[0:F, :] = xm.astype(jnp.bfloat16)
        stacked_ref[0:F, 0:d] = jnp.zeros((F, d), jnp.bfloat16)

        stacked_ref[F:2 * F, :] = out.astype(jnp.bfloat16)                         # x[t]

        xp = pltpu.roll(out, shift=T - d, axis=1)                                  # x[t+d] (+wrap)
        stacked_ref[2 * F:3 * F, :] = xp.astype(jnp.bfloat16)
        stacked_ref[2 * F:3 * F, T - d:T] = jnp.zeros((F, d), jnp.bfloat16)

        # Fused 3-tap dilated conv as a single (F, 3F) @ (3F, T) MXU matmul.
        h = (jnp.dot(wd_ref[i], stacked_ref[...], preferred_element_type=jnp.float32)
             + bd_ref[i])                                                          # (F, T) f32
        h = jnp.maximum(h, 0.0)                                                    # ReLU (f32)
        h = (jnp.dot(w1_ref[i], h.astype(jnp.bfloat16),
                     preferred_element_type=jnp.float32) + b1_ref[i])              # 1x1 conv
        out = out + h                                                              # residual (dropout = identity)

    # output 1x1 conv: (C, F) @ (F, T) + (C, 1)
    o_ref[0] = (jnp.dot(w_out_ref[...], out.astype(jnp.bfloat16),
                        preferred_element_type=jnp.float32) + b_out_ref[...])


def _vmem_limit_bytes():
    """Generation-aware scoped-VMEM cap: ~3/4 of physical, capped at 96 MiB."""
    cap = 128 * 1024 * 1024
    try:
        cap = int(getattr(pltpu.get_tpu_info(), "vmem_capacity_bytes", cap))
    except Exception:
        pass
    return int(min(96 * 1024 * 1024, (3 * cap) // 4))


def refinement_pallas(x_nct, params, num_layers):
    """x_nct: (N, dim, T) float32.  Returns (N, num_classes, T) float32."""
    N, D, T = x_nct.shape
    w_in, b_in, wd, bd, w1, b1, w_out, b_out = params
    F = w_in.shape[0]
    C = w_out.shape[0]

    # Pre-cast activation to bf16 (halves input DMA; matmuls are bf16 -> f32 accumulate).
    x_bf = x_nct.astype(jnp.bfloat16)

    kernel = functools.partial(_refinement_kernel, num_layers=num_layers)

    return pl.pallas_call(
        kernel,
        out_shape=jax.ShapeDtypeStruct((N, C, T), jnp.float32),
        grid_spec=pltpu.PrefetchScalarGridSpec(
            num_scalar_prefetch=0,
            grid=(N,),
            in_specs=[
                pl.BlockSpec((1, D, T), lambda b: (b, 0, 0)),                    # x (native NCT, bf16)
                pl.BlockSpec((F, D), lambda b: (0, 0)),                          # w_in (bf16)
                pl.BlockSpec((F, 1), lambda b: (0, 0)),                          # b_in (f32)
                pl.BlockSpec((num_layers, F, 3 * F), lambda b: (0, 0, 0)),       # wd fused (bf16)
                pl.BlockSpec((num_layers, F, 1), lambda b: (0, 0, 0)),           # bd (f32)
                pl.BlockSpec((num_layers, F, F), lambda b: (0, 0, 0)),           # w1 (bf16)
                pl.BlockSpec((num_layers, F, 1), lambda b: (0, 0, 0)),           # b1 (f32)
                pl.BlockSpec((C, F), lambda b: (0, 0)),                          # w_out (bf16)
                pl.BlockSpec((C, 1), lambda b: (0, 0)),                          # b_out (f32)
            ],
            out_specs=pl.BlockSpec((1, C, T), lambda b: (b, 0, 0)),
            scratch_shapes=[pltpu.VMEM((3 * F, T), jnp.bfloat16)],               # reused tap slab
        ),
        compiler_params=pltpu.CompilerParams(
            dimension_semantics=("parallel",),
            vmem_limit_bytes=_vmem_limit_bytes(),
        ),
    )(x_bf, w_in, b_in, wd, bd, w1, b1, w_out, b_out)


# ----------------------------- parameter setup ------------------------------

def make_params(key, num_layers, num_f_maps, dim, num_classes):
    """Deterministic synthetic parameters in PyTorch Conv1d shapes + kernel-side layout."""
    ks = jax.random.split(key, 6 + 4 * num_layers)
    scale = 0.1
    it = iter(ks)
    # conv_1x1: (F, dim, 1), (F,)
    w_in_pt = jax.random.normal(next(it), (num_f_maps, dim, 1), jnp.float32) * scale
    b_in_pt = jax.random.normal(next(it), (num_f_maps,), jnp.float32) * scale
    wd_pt, bd_pt, w1_pt, b1_pt = [], [], [], []
    for _ in range(num_layers):
        wd_pt.append(jax.random.normal(next(it), (num_f_maps, num_f_maps, 3), jnp.float32) * scale)
        bd_pt.append(jax.random.normal(next(it), (num_f_maps,), jnp.float32) * scale)
        w1_pt.append(jax.random.normal(next(it), (num_f_maps, num_f_maps, 1), jnp.float32) * scale)
        b1_pt.append(jax.random.normal(next(it), (num_f_maps,), jnp.float32) * scale)
    w_out_pt = jax.random.normal(next(it), (num_classes, num_f_maps, 1), jnp.float32) * scale
    b_out_pt = jax.random.normal(next(it), (num_classes,), jnp.float32) * scale

    pt_params = dict(w_in=w_in_pt, b_in=b_in_pt, wd=wd_pt, bd=bd_pt,
                     w1=w1_pt, b1=b1_pt, w_out=w_out_pt, b_out=b_out_pt)

    # kernel-side tensors: channels-on-sublane layout, taps fused along K, weights in bf16.
    # (F should be a multiple of 16 for clean bf16 sublane packing of the tap slab.)
    w_in = w_in_pt[:, :, 0].astype(jnp.bfloat16)                                  # (F, D)
    b_in = b_in_pt[:, None]                                                       # (F, 1) f32
    wd = jnp.stack([jnp.concatenate([w[:, :, 0], w[:, :, 1], w[:, :, 2]], axis=1)
                    for w in wd_pt]).astype(jnp.bfloat16)                         # (L, F, 3F)
    bd = jnp.stack([b[:, None] for b in bd_pt])                                   # (L, F, 1) f32
    w1 = jnp.stack([w[:, :, 0] for w in w1_pt]).astype(jnp.bfloat16)              # (L, F, F)
    b1 = jnp.stack([b[:, None] for b in b1_pt])                                   # (L, F, 1) f32
    w_out = w_out_pt[:, :, 0].astype(jnp.bfloat16)                                # (C, F)
    b_out = b_out_pt[:, None]                                                     # (C, 1) f32

    kernel_params = (w_in, b_in, wd, bd, w1, b1, w_out, b_out)
    return kernel_params, pt_params


# ------------------------- pure-JAX reference (NCT) -------------------------

def refinement_ref(x, pt, num_layers):
    def conv1x1(h, w, b):  # h: (N, Cin, T), w: (Cout, Cin, 1)
        return jnp.einsum('oi,nit->not', w[:, :, 0], h) + b[None, :, None]

    def dilated_conv(h, w, b, d):  # w: (Cout, Cin, 3)
        T = h.shape[-1]
        hp = jnp.pad(h, ((0, 0), (0, 0), (d, d)))
        out = sum(jnp.einsum('oi,nit->not', w[:, :, k], hp[:, :, k * d:k * d + T])
                  for k in range(3))
        return out + b[None, :, None]

    out = conv1x1(x, pt['w_in'], pt['b_in'])
    for i in range(num_layers):
        d = 2 ** i
        h = jax.nn.relu(dilated_conv(out, pt['wd'][i], pt['bd'][i], d))
        h = conv1x1(h, pt['w1'][i], pt['b1'][i])
        out = out + h
    return conv1x1(out, pt['w_out'], pt['b_out'])


if __name__ == "__main__":
    # small, forward-consistent shapes; T is a lane-dense multiple of 128.
    num_layers, num_f_maps, dim, num_classes = 3, 32, 16, 8
    N, T = 2, 128

    key = jax.random.PRNGKey(0)
    kp, kx = jax.random.split(key)
    kernel_params, pt_params = make_params(kp, num_layers, num_f_maps, dim, num_classes)
    x = jax.random.normal(kx, (N, dim, T), jnp.float32)

    y = refinement_pallas(x, kernel_params, num_layers)
    y = jax.block_until_ready(y)

    y_ref = refinement_ref(x, pt_params, num_layers)
    assert y.shape == (N, num_classes, T)
    # bf16 MXU inputs with f32 accumulation -> relaxed tolerance vs the f32 reference.
    assert jnp.allclose(y, y_ref, rtol=5e-2, atol=5e-2), "mismatch vs reference"

    print("KERNEL_OK")
</pallas_src>

<mosaic_0001>
module attributes {stable_mosaic.version = 11 : i64} {
  func.func @_refinement_kernel(%arg0: i32, %arg1: memref<1x16x128xbf16, #tpu.memory_space<vmem>>, %arg2: memref<32x16xbf16, #tpu.memory_space<vmem>>, %arg3: memref<32x1xf32, #tpu.memory_space<vmem>>, %arg4: memref<3x32x96xbf16, #tpu.memory_space<vmem>>, %arg5: memref<3x32x1xf32, #tpu.memory_space<vmem>>, %arg6: memref<3x32x32xbf16, #tpu.memory_space<vmem>>, %arg7: memref<3x32x1xf32, #tpu.memory_space<vmem>>, %arg8: memref<8x32xbf16, #tpu.memory_space<vmem>>, %arg9: memref<8x1xf32, #tpu.memory_space<vmem>>, %arg10: memref<1x8x128xf32, #tpu.memory_space<vmem>>, %arg11: memref<96x128xbf16, #tpu.memory_space<vmem>>) attributes {dimension_semantics = [#tpu.dimension_semantics<parallel>], iteration_bounds = array<i64: 2>, scalar_prefetch = 0 : i64, scratch_operands = 1 : i64, tpu.core_type = #tpu.core_type<tc>, window_params = [{transform_indices = @transform_0, window_bounds = array<i64: 1, 16, 128>}, {pipeline_mode = #tpu.pipeline_mode<synchronous>, transform_indices = @transform_1, window_bounds = array<i64: 32, 16>}, {pipeline_mode = #tpu.pipeline_mode<synchronous>, transform_indices = @transform_2, window_bounds = array<i64: 32, 1>}, {pipeline_mode = #tpu.pipeline_mode<synchronous>, transform_indices = @transform_3, window_bounds = array<i64: 3, 32, 96>}, {pipeline_mode = #tpu.pipeline_mode<synchronous>, transform_indices = @transform_4, window_bounds = array<i64: 3, 32, 1>}, {pipeline_mode = #tpu.pipeline_mode<synchronous>, transform_indices = @transform_5, window_bounds = array<i64: 3, 32, 32>}, {pipeline_mode = #tpu.pipeline_mode<synchronous>, transform_indices = @transform_6, window_bounds = array<i64: 3, 32, 1>}, {pipeline_mode = #tpu.pipeline_mode<synchronous>, transform_indices = @transform_7, window_bounds = array<i64: 8, 32>}, {pipeline_mode = #tpu.pipeline_mode<synchronous>, transform_indices = @transform_8, window_bounds = array<i64: 8, 1>}, {transform_indices = @transform_9, window_bounds = array<i64: 1, 8, 128>}]} {
    %c0 = arith.constant 0 : index
    %c0_0 = arith.constant 0 : index
    %c0_1 = arith.constant 0 : index
    %0 = vector.load %arg1[%c0, %c0_0, %c0_1] : memref<1x16x128xbf16, #tpu.memory_space<vmem>>, vector<1x16x128xbf16>
    %1 = vector.shape_cast %0 : vector<1x16x128xbf16> to vector<16x128xbf16>
    %c0_2 = arith.constant 0 : index
    %c0_3 = arith.constant 0 : index
    %2 = vector.load %arg2[%c0_2, %c0_3] : memref<32x16xbf16, #tpu.memory_space<vmem>>, vector<32x16xbf16>
    %cst = arith.constant dense<0.000000e+00> : vector<32x128xf32>
    %3 = tpu.matmul %2, %1, %cst {dimension_numbers = #tpu.dot_dimension_numbers<[1], [0], [0], [1], [0, 0, 1, 1], [], []>} : vector<32x16xbf16>, vector<16x128xbf16>, vector<32x128xf32> -> vector<32x128xf32>
    %c0_4 = arith.constant 0 : index
    %c0_5 = arith.constant 0 : index
    %4 = vector.load %arg3[%c0_4, %c0_5] : memref<32x1xf32, #tpu.memory_space<vmem>>, vector<32x1xf32>
    %5 = vector.broadcast %4 : vector<32x1xf32> to vector<32x128xf32>
    %6 = arith.addf %3, %5 : vector<32x128xf32>
    %c1_i32 = arith.constant 1 : i32
    %7 = tpu.dynamic_rotate %6 by %c1_i32 dim 1 : vector<32x128xf32>, i32 -> vector<32x128xf32>
    %8 = arith.truncf %7 : vector<32x128xf32> to vector<32x128xbf16>
    %c0_6 = arith.constant 0 : index
    %c0_7 = arith.constant 0 : index
    %9 = vector.load %arg11[%c0_6, %c0_7] : memref<96x128xbf16, #tpu.memory_space<vmem>>, vector<32x128xbf16>
    tpu.vector_store %arg11[%c0_6, %c0_7], %8 {strides = array<i32>} : memref<96x128xbf16, #tpu.memory_space<vmem>>, vector<32x128xbf16>,
    %cst_8 = arith.constant 0.000000e+00 : bf16
    %10 = vector.broadcast %cst_8 : bf16 to vector<32x1xbf16>
    %c0_9 = arith.constant 0 : index
    %c0_10 = arith.constant 0 : index
    %11 = vector.load %arg11[%c0_9, %c0_10] : memref<96x128xbf16, #tpu.memory_space<vmem>>, vector<32x1xbf16>
    tpu.vector_store %arg11[%c0_9, %c0_10], %10 {strides = array<i32>} : memref<96x128xbf16, #tpu.memory_space<vmem>>, vector<32x1xbf16>,
    %12 = arith.truncf %6 : vector<32x128xf32> to vector<32x128xbf16>
    %c32 = arith.constant 32 : index
    %c0_11 = arith.constant 0 : index
    %13 = vector.load %arg11[%c32, %c0_11] : memref<96x128xbf16, #tpu.memory_space<vmem>>, vector<32x128xbf16>
    tpu.vector_store %arg11[%c32, %c0_11], %12 {strides = array<i32>} : memref<96x128xbf16, #tpu.memory_space<vmem>>, vector<32x128xbf16>,
    %c127_i32 = arith.constant 127 : i32
    %14 = tpu.dynamic_rotate %6 by %c127_i32 dim 1 : vector<32x128xf32>, i32 -> vector<32x128xf32>
    %15 = arith.truncf %14 : vector<32x128xf32> to vector<32x128xbf16>
    %c64 = arith.constant 64 : index
    %c0_12 = arith.constant 0 : index
    %16 = vector.load %arg11[%c64, %c0_12] : memref<96x128xbf16, #tpu.memory_space<vmem>>, vector<32x128xbf16>
    tpu.vector_store %arg11[%c64, %c0_12], %15 {strides = array<i32>} : memref<96x128xbf16, #tpu.memory_space<vmem>>, vector<32x128xbf16>,
    %cst_13 = arith.constant 0.000000e+00 : bf16
    %17 = vector.broadcast %cst_13 : bf16 to vector<32x1xbf16>
    %c64_14 = arith.constant 64 : index
    %c127 = arith.constant 127 : index
    %18 = vector.load %arg11[%c64_14, %c127] : memref<96x128xbf16, #tpu.memory_space<vmem>>, vector<32x1xbf16>
    tpu.vector_store %arg11[%c64_14, %c127], %17 {strides = array<i32>} : memref<96x128xbf16, #tpu.memory_space<vmem>>, vector<32x1xbf16>,
    %c0_15 = arith.constant 0 : index
    %c0_16 = arith.constant 0 : index
    %c0_17 = arith.constant 0 : index
    %19 = vector.load %arg4[%c0_15, %c0_16, %c0_17] : memref<3x32x96xbf16, #tpu.memory_space<vmem>>, vector<1x32x96xbf16>
    %20 = vector.shape_cast %19 : vector<1x32x96xbf16> to vector<32x96xbf16>
    %c0_18 = arith.constant 0 : index
    %c0_19 = arith.constant 0 : index
    %21 = vector.load %arg11[%c0_18, %c0_19] : memref<96x128xbf16, #tpu.memory_space<vmem>>, vector<96x128xbf16>
    %cst_20 = arith.constant dense<0.000000e+00> : vector<32x128xf32>
    %22 = tpu.matmul %20, %21, %cst_20 {dimension_numbers = #tpu.dot_dimension_numbers<[1], [0], [0], [1], [0, 0, 1, 1], [], []>} : vector<32x96xbf16>, vector<96x128xbf16>, vector<32x128xf32> -> vector<32x128xf32>
    %c0_21 = arith.constant 0 : index
    %c0_22 = arith.constant 0 : index
    %c0_23 = arith.constant 0 : index
    %23 = vector.load %arg5[%c0_21, %c0_22, %c0_23] : memref<3x32x1xf32, #tpu.memory_space<vmem>>, vector<1x32x1xf32>
    %24 = vector.shape_cast %23 : vector<1x32x1xf32> to vector<32x1xf32>
    %25 = vector.broadcast %24 : vector<32x1xf32> to vector<32x128xf32>
    %26 = arith.addf %22, %25 : vector<32x128xf32>
    %cst_24 = arith.constant 0.000000e+00 : f32
    %27 = vector.broadcast %cst_24 : f32 to vector<32x128xf32>
    %28 = arith.maximumf %26, %27 : vector<32x128xf32>
    %c0_25 = arith.constant 0 : index
    %c0_26 = arith.constant 0 : index
    %c0_27 = arith.constant 0 : index
    %29 = vector.load %arg6[%c0_25, %c0_26, %c0_27] : memref<3x32x32xbf16, #tpu.memory_space<vmem>>, vector<1x32x32xbf16>
    %30 = vector.shape_cast %29 : vector<1x32x32xbf16> to vector<32x32xbf16>
    %31 = arith.truncf %28 : vector<32x128xf32> to vector<32x128xbf16>
    %cst_28 = arith.constant dense<0.000000e+00> : vector<32x128xf32>
    %32 = tpu.matmul %30, %31, %cst_28 {dimension_numbers = #tpu.dot_dimension_numbers<[1], [0], [0], [1], [0, 0, 1, 1], [], []>} : vector<32x32xbf16>, vector<32x128xbf16>, vector<32x128xf32> -> vector<32x128xf32>
    %c0_29 = arith.constant 0 : index
    %c0_30 = arith.constant 0 : index
    %c0_31 = arith.constant 0 : index
    %33 = vector.load %arg7[%c0_29, %c0_30, %c0_31] : memref<3x32x1xf32, #tpu.memory_space<vmem>>, vector<1x32x1xf32>
    %34 = vector.shape_cast %33 : vector<1x32x1xf32> to vector<32x1xf32>
    %35 = vector.broadcast %34 : vector<32x1xf32> to vector<32x128xf32>
    %36 = arith.addf %32, %35 : vector<32x128xf32>
    %37 = arith.addf %6, %36 : vector<32x128xf32>
    %c2_i32 = arith.constant 2 : i32
    %38 = tpu.dynamic_rotate %37 by %c2_i32 dim 1 : vector<32x128xf32>, i32 -> vector<32x128xf32>
    %39 = arith.truncf %38 : vector<32x128xf32> to vector<32x128xbf16>
    %c0_32 = arith.constant 0 : index
    %c0_33 = arith.constant 0 : index
    %40 = vector.load %arg11[%c0_32, %c0_33] : memref<96x128xbf16, #tpu.memory_space<vmem>>, vector<32x128xbf16>
    tpu.vector_store %arg11[%c0_32, %c0_33], %39 {strides = array<i32>} : memref<96x128xbf16, #tpu.memory_space<vmem>>, vector<32x128xbf16>,
    %cst_34 = arith.constant 0.000000e+00 : bf16
    %41 = vector.broadcast %cst_34 : bf16 to vector<32x2xbf16>
    %c0_35 = arith.constant 0 : index
    %c0_36 = arith.constant 0 : index
    %42 = vector.load %arg11[%c0_35, %c0_36] : memref<96x128xbf16, #tpu.memory_space<vmem>>, vector<32x2xbf16>
    tpu.vector_store %arg11[%c0_35, %c0_36], %41 {strides = array<i32>} : memref<96x128xbf16, #tpu.memory_space<vmem>>, vector<32x2xbf16>,
    %43 = arith.truncf %37 : vector<32x128xf32> to vector<32x128xbf16>
    %c32_37 = arith.constant 32 : index
    %c0_38 = arith.constant 0 : index
    %44 = vector.load %arg11[%c32_37, %c0_38] : memref<96x128xbf16, #tpu.memory_space<vmem>>, vector<32x128xbf16>
    tpu.vector_store %arg11[%c32_37, %c0_38], %43 {strides = array<i32>} : memref<96x128xbf16, #tpu.memory_space<vmem>>, vector<32x128xbf16>,
    %c126_i32 = arith.constant 126 : i32
    %45 = tpu.dynamic_rotate %37 by %c126_i32 dim 1 : vector<32x128xf32>, i32 -> vector<32x128xf32>
    %46 = arith.truncf %45 : vector<32x128xf32> to vector<32x128xbf16>
    %c64_39 = arith.constant 64 : index
    %c0_40 = arith.constant 0 : index
    %47 = vector.load %arg11[%c64_39, %c0_40] : memref<96x128xbf16, #tpu.memory_space<vmem>>, vector<32x128xbf16>
    tpu.vector_store %arg11[%c64_39, %c0_40], %46 {strides = array<i32>} : memref<96x128xbf16, #tpu.memory_space<vmem>>, vector<32x128xbf16>,
    %cst_41 = arith.constant 0.000000e+00 : bf16
    %48 = vector.broadcast %cst_41 : bf16 to vector<32x2xbf16>
    %c64_42 = arith.constant 64 : index
    %c126 = arith.constant 126 : index
    %49 = vector.load %arg11[%c64_42, %c126] : memref<96x128xbf16, #tpu.memory_space<vmem>>, vector<32x2xbf16>
    tpu.vector_store %arg11[%c64_42, %c126], %48 {strides = array<i32>} : memref<96x128xbf16, #tpu.memory_space<vmem>>, vector<32x2xbf16>,
    %c1 = arith.constant 1 : index
    %c0_43 = arith.constant 0 : index
    %c0_44 = arith.constant 0 : index
    %50 = vector.load %arg4[%c1, %c0_43, %c0_44] : memref<3x32x96xbf16, #tpu.memory_space<vmem>>, vector<1x32x96xbf16>
    %51 = vector.shape_cast %50 : vector<1x32x96xbf16> to vector<32x96xbf16>
    %c0_45 = arith.constant 0 : index
    %c0_46 = arith.constant 0 : index
    %52 = vector.load %arg11[%c0_45, %c0_46] : memref<96x128xbf16, #tpu.memory_space<vmem>>, vector<96x128xbf16>
    %cst_47 = arith.constant dense<0.000000e+00> : vector<32x128xf32>
    %53 = tpu.matmul %51, %52, %cst_47 {dimension_numbers = #tpu.dot_dimension_numbers<[1], [0], [0], [1], [0, 0, 1, 1], [], []>} : vector<32x96xbf16>, vector<96x128xbf16>, vector<32x128xf32> -> vector<32x128xf32>
    %c1_48 = arith.constant 1 : index
    %c0_49 = arith.constant 0 : index
    %c0_50 = arith.constant 0 : index
    %54 = vector.load %arg5[%c1_48, %c0_49, %c0_50] : memref<3x32x1xf32, #tpu.memory_space<vmem>>, vector<1x32x1xf32>
    %55 = vector.shape_cast %54 : vector<1x32x1xf32> to vector<32x1xf32>
    %56 = vector.broadcast %55 : vector<32x1xf32> to vector<32x128xf32>
    %57 = arith.addf %53, %56 : vector<32x128xf32>
    %cst_51 = arith.constant 0.000000e+00 : f32
    %58 = vector.broadcast %cst_51 : f32 to vector<32x128xf32>
    %59 = arith.maximumf %57, %58 : vector<32x128xf32>
    %c1_52 = arith.constant 1 : index
    %c0_53 = arith.constant 0 : index
    %c0_54 = arith.constant 0 : index
    %60 = vector.load %arg6[%c1_52, %c0_53, %c0_54] : memref<3x32x32xbf16, #tpu.memory_space<vmem>>, vector<1x32x32xbf16>
    %61 = vector.shape_cast %60 : vector<1x32x32xbf16> to vector<32x32xbf16>
    %62 = arith.truncf %59 : vector<32x128xf32> to vector<32x128xbf16>
    %cst_55 = arith.constant dense<0.000000e+00> : vector<32x128xf32>
    %63 = tpu.matmul %61, %62, %cst_55 {dimension_numbers = #tpu.dot_dimension_numbers<[1], [0], [0], [1], [0, 0, 1, 1], [], []>} : vector<32x32xbf16>, vector<32x128xbf16>, vector<32x128xf32> -> vector<32x128xf32>
    %c1_56 = arith.constant 1 : index
    %c0_57 = arith.constant 0 : index
    %c0_58 = arith.constant 0 : index
    %64 = vector.load %arg7[%c1_56, %c0_57, %c0_58] : memref<3x32x1xf32, #tpu.memory_space<vmem>>, vector<1x32x1xf32>
    %65 = vector.shape_cast %64 : vector<1x32x1xf32> to vector<32x1xf32>
    %66 = vector.broadcast %65 : vector<32x1xf32> to vector<32x128xf32>
    %67 = arith.addf %63, %66 : vector<32x128xf32>
    %68 = arith.addf %37, %67 : vector<32x128xf32>
    %c4_i32 = arith.constant 4 : i32
    %69 = tpu.dynamic_rotate %68 by %c4_i32 dim 1 : vector<32x128xf32>, i32 -> vector<32x128xf32>
    %70 = arith.truncf %69 : vector<32x128xf32> to vector<32x128xbf16>
    %c0_59 = arith.constant 0 : index
    %c0_60 = arith.constant 0 : index
    %71 = vector.load %arg11[%c0_59, %c0_60] : memref<96x128xbf16, #tpu.memory_space<vmem>>, vector<32x128xbf16>
    tpu.vector_store %arg11[%c0_59, %c0_60], %70 {strides = array<i32>} : memref<96x128xbf16, #tpu.memory_space<vmem>>, vector<32x128xbf16>,
    %cst_61 = arith.constant 0.000000e+00 : bf16
    %72 = vector.broadcast %cst_61 : bf16 to vector<32x4xbf16>
    %c0_62 = arith.constant 0 : index
    %c0_63 = arith.constant 0 : index
    %73 = vector.load %arg11[%c0_62, %c0_63] : memref<96x128xbf16, #tpu.memory_space<vmem>>, vector<32x4xbf16>
    tpu.vector_store %arg11[%c0_62, %c0_63], %72 {strides = array<i32>} : memref<96x128xbf16, #tpu.memory_space<vmem>>, vector<32x4xbf16>,
    %74 = arith.truncf %68 : vector<32x128xf32> to vector<32x128xbf16>
    %c32_64 = arith.constant 32 : index
    %c0_65 = arith.constant 0 : index
    %75 = vector.load %arg11[%c32_64, %c0_65] : memref<96x128xbf16, #tpu.memory_space<vmem>>, vector<32x128xbf16>
    tpu.vector_store %arg11[%c32_64, %c0_65], %74 {strides = array<i32>} : memref<96x128xbf16, #tpu.memory_space<vmem>>, vector<32x128xbf16>,
    %c124_i32 = arith.constant 124 : i32
    %76 = tpu.dynamic_rotate %68 by %c124_i32 dim 1 : vector<32x128xf32>, i32 -> vector<32x128xf32>
    %77 = arith.truncf %76 : vector<32x128xf32> to vector<32x128xbf16>
    %c64_66 = arith.constant 64 : index
    %c0_67 = arith.constant 0 : index
    %78 = vector.load %arg11[%c64_66, %c0_67] : memref<96x128xbf16, #tpu.memory_space<vmem>>, vector<32x128xbf16>
    tpu.vector_store %arg11[%c64_66, %c0_67], %77 {strides = array<i32>} : memref<96x128xbf16, #tpu.memory_space<vmem>>, vector<32x128xbf16>,
    %cst_68 = arith.constant 0.000000e+00 : bf16
    %79 = vector.broadcast %cst_68 : bf16 to vector<32x4xbf16>
    %c64_69 = arith.constant 64 : index
    %c124 = arith.constant 124 : index
    %80 = vector.load %arg11[%c64_69, %c124] : memref<96x128xbf16, #tpu.memory_space<vmem>>, vector<32x4xbf16>
    tpu.vector_store %arg11[%c64_69, %c124], %79 {strides = array<i32>} : memref<96x128xbf16, #tpu.memory_space<vmem>>, vector<32x4xbf16>,
    %c2 = arith.constant 2 : index
    %c0_70 = arith.constant 0 : index
    %c0_71 = arith.constant 0 : index
    %81 = vector.load %arg4[%c2, %c0_70, %c0_71] : memref<3x32x96xbf16, #tpu.memory_space<vmem>>, vector<1x32x96xbf16>
    %82 = vector.shape_cast %81 : vector<1x32x96xbf16> to vector<32x96xbf16>
    %c0_72 = arith.constant 0 : index
    %c0_73 = arith.constant 0 : index
    %83 = vector.load %arg11[%c0_72, %c0_73] : memref<96x128xbf16, #tpu.memory_space<vmem>>, vector<96x128xbf16>
    %cst_74 = arith.constant dense<0.000000e+00> : vector<32x128xf32>
    %84 = tpu.matmul %82, %83, %cst_74 {dimension_numbers = #tpu.dot_dimension_numbers<[1], [0], [0], [1], [0, 0, 1, 1], [], []>} : vector<32x96xbf16>, vector<96x128xbf16>, vector<32x128xf32> -> vector<32x128xf32>
    %c2_75 = arith.constant 2 : index
    %c0_76 = arith.constant 0 : index
    %c0_77 = arith.constant 0 : index
    %85 = vector.load %arg5[%c2_75, %c0_76, %c0_77] : memref<3x32x1xf32, #tpu.memory_space<vmem>>, vector<1x32x1xf32>
    %86 = vector.shape_cast %85 : vector<1x32x1xf32> to vector<32x1xf32>
    %87 = vector.broadcast %86 : vector<32x1xf32> to vector<32x128xf32>
    %88 = arith.addf %84, %87 : vector<32x128xf32>
    %cst_78 = arith.constant 0.000000e+00 : f32
    %89 = vector.broadcast %cst_78 : f32 to vector<32x128xf32>
    %90 = arith.maximumf %88, %89 : vector<32x128xf32>
    %c2_79 = arith.constant 2 : index
    %c0_80 = arith.constant 0 : index
    %c0_81 = arith.constant 0 : index
    %91 = vector.load %arg6[%c2_79, %c0_80, %c0_81] : memref<3x32x32xbf16, #tpu.memory_space<vmem>>, vector<1x32x32xbf16>
    %92 = vector.shape_cast %91 : vector<1x32x32xbf16> to vector<32x32xbf16>
    %93 = arith.truncf %90 : vector<32x128xf32> to vector<32x128xbf16>
    %cst_82 = arith.constant dense<0.000000e+00> : vector<32x128xf32>
    %94 = tpu.matmul %92, %93, %cst_82 {dimension_numbers = #tpu.dot_dimension_numbers<[1], [0], [0], [1], [0, 0, 1, 1], [], []>} : vector<32x32xbf16>, vector<32x128xbf16>, vector<32x128xf32> -> vector<32x128xf32>
    %c2_83 = arith.constant 2 : index
    %c0_84 = arith.constant 0 : index
    %c0_85 = arith.constant 0 : index
    %95 = vector.load %arg7[%c2_83, %c0_84, %c0_85] : memref<3x32x1xf32, #tpu.memory_space<vmem>>, vector<1x32x1xf32>
    %96 = vector.shape_cast %95 : vector<1x32x1xf32> to vector<32x1xf32>
    %97 = vector.broadcast %96 : vector<32x1xf32> to vector<32x128xf32>
    %98 = arith.addf %94, %97 : vector<32x128xf32>
    %99 = arith.addf %68, %98 : vector<32x128xf32>
    %c0_86 = arith.constant 0 : index
    %c0_87 = arith.constant 0 : index
    %100 = vector.load %arg8[%c0_86, %c0_87] : memref<8x32xbf16, #tpu.memory_space<vmem>>, vector<8x32xbf16>
    %101 = arith.truncf %99 : vector<32x128xf32> to vector<32x128xbf16>
    %cst_88 = arith.constant dense<0.000000e+00> : vector<8x128xf32>
    %102 = tpu.matmul %100, %101, %cst_88 {dimension_numbers = #tpu.dot_dimension_numbers<[1], [0], [0], [1], [0, 0, 1, 1], [], []>} : vector<8x32xbf16>, vector<32x128xbf16>, vector<8x128xf32> -> vector<8x128xf32>
    %c0_89 = arith.constant 0 : index
    %c0_90 = arith.constant 0 : index
    %103 = vector.load %arg9[%c0_89, %c0_90] : memref<8x1xf32, #tpu.memory_space<vmem>>, vector<8x1xf32>
    %104 = vector.broadcast %103 : vector<8x1xf32> to vector<8x128xf32>
    %105 = arith.addf %102, %104 : vector<8x128xf32>
    %c0_91 = arith.constant 0 : index
    %c0_92 = arith.constant 0 : index
    %c0_93 = arith.constant 0 : index
    %106 = vector.load %arg10[%c0_91, %c0_92, %c0_93] : memref<1x8x128xf32, #tpu.memory_space<vmem>>, vector<1x8x128xf32>
    %107 = vector.shape_cast %106 : vector<1x8x128xf32> to vector<8x128xf32>
    %108 = vector.shape_cast %105 : vector<8x128xf32> to vector<1x8x128xf32>
    tpu.vector_store %arg10[%c0_91, %c0_92, %c0_93], %108 {strides = array<i32>} : memref<1x8x128xf32, #tpu.memory_space<vmem>>, vector<1x8x128xf32>,
    return
  }
  func.func @transform_0(%arg0: i32) -> (i32, i32, i32) {
    %c0_i32 = arith.constant 0 : i32
    %c0_i32_0 = arith.constant 0 : i32
    %c0_i32_1 = arith.constant 0 : i32
    return %arg0, %c0_i32, %c0_i32_0 : i32, i32, i32
  }
  func.func @transform_1(%arg0: i32) -> (i32, i32) {
    %c0_i32 = arith.constant 0 : i32
    %c0_i32_0 = arith.constant 0 : i32
    %c0_i32_1 = arith.constant 0 : i32
    return %c0_i32, %c0_i32_0 : i32, i32
  }
  func.func @transform_2(%arg0: i32) -> (i32, i32) {
    %c0_i32 = arith.constant 0 : i32
    %c0_i32_0 = arith.constant 0 : i32
    %c0_i32_1 = arith.constant 0 : i32
    return %c0_i32, %c0_i32_0 : i32, i32
  }
  func.func @transform_3(%arg0: i32) -> (i32, i32, i32) {
    %c0_i32 = arith.constant 0 : i32
    %c0_i32_0 = arith.constant 0 : i32
    %c0_i32_1 = arith.constant 0 : i32
    %c0_i32_2 = arith.constant 0 : i32
    return %c0_i32, %c0_i32_0, %c0_i32_1 : i32, i32, i32
  }
  func.func @transform_4(%arg0: i32) -> (i32, i32, i32) {
    %c0_i32 = arith.constant 0 : i32
    %c0_i32_0 = arith.constant 0 : i32
    %c0_i32_1 = arith.constant 0 : i32
    %c0_i32_2 = arith.constant 0 : i32
    return %c0_i32, %c0_i32_0, %c0_i32_1 : i32, i32, i32
  }
  func.func @transform_5(%arg0: i32) -> (i32, i32, i32) {
    %c0_i32 = arith.constant 0 : i32
    %c0_i32_0 = arith.constant 0 : i32
    %c0_i32_1 = arith.constant 0 : i32
    %c0_i32_2 = arith.constant 0 : i32
    return %c0_i32, %c0_i32_0, %c0_i32_1 : i32, i32, i32
  }
  func.func @transform_6(%arg0: i32) -> (i32, i32, i32) {
    %c0_i32 = arith.constant 0 : i32
    %c0_i32_0 = arith.constant 0 : i32
    %c0_i32_1 = arith.constant 0 : i32
    %c0_i32_2 = arith.constant 0 : i32
    return %c0_i32, %c0_i32_0, %c0_i32_1 : i32, i32, i32
  }
  func.func @transform_7(%arg0: i32) -> (i32, i32) {
    %c0_i32 = arith.constant 0 : i32
    %c0_i32_0 = arith.constant 0 : i32
    %c0_i32_1 = arith.constant 0 : i32
    return %c0_i32, %c0_i32_0 : i32, i32
  }
  func.func @transform_8(%arg0: i32) -> (i32, i32) {
    %c0_i32 = arith.constant 0 : i32
    %c0_i32_0 = arith.constant 0 : i32
    %c0_i32_1 = arith.constant 0 : i32
    return %c0_i32, %c0_i32_0 : i32, i32
  }
  func.func @transform_9(%arg0: i32) -> (i32, i32, i32) {
    %c0_i32 = arith.constant 0 : i32
    %c0_i32_0 = arith.constant 0 : i32
    %c0_i32_1 = arith.constant 0 : i32
    return %arg0, %c0_i32, %c0_i32_0 : i32, i32, i32
  }
}

</mosaic_0001>

<llo_original>
// kernel: tpu_custom_call.1
$region0: #{tpu_custom_call.1}
  #allocation0 [shape = 'u32[]', space=smem, size = 0x4, offset = 0x4, fixed_abs, tag = 'smem constant byte address 0x4 - core index']
  #allocation1 [shape = 'u32[72,128]{1,0:T(1,128)}', space=vmem, size = 0x9000, scoped, tag = 'internal scratch']
  #allocation2 [shape = 'bf16[96,128]{1,0:T(8,128)(2,1)}', space=vmem, size = 0x6000, scoped, tag = 'scratch operand']
  %s0 = inlined_call_operand.vmem [shape: bf16[2,16,128], index: 0, kind: input, shape index: {}]
  %s1 = inlined_call_operand.vmem [shape: bf16[32,16], index: 1, kind: input, shape index: {}]
  %s2 = inlined_call_operand.vmem [shape: f32[32,1], index: 2, kind: input, shape index: {}]
  %s3 = inlined_call_operand.vmem [shape: bf16[3,32,96], index: 3, kind: input, shape index: {}]
  %s4 = inlined_call_operand.vmem [shape: f32[3,32,1], index: 4, kind: input, shape index: {}]
  %s5 = inlined_call_operand.vmem [shape: bf16[3,32,32], index: 5, kind: input, shape index: {}]
  %s6 = inlined_call_operand.vmem [shape: f32[3,32,1], index: 6, kind: input, shape index: {}]
  %s7 = inlined_call_operand.vmem [shape: bf16[8,32], index: 7, kind: input, shape index: {}]
  %s8 = inlined_call_operand.vmem [shape: f32[8,1], index: 8, kind: input, shape index: {}]
  %s9 = inlined_call_operand.hbm [shape: f32[2,8,128], index: 9, kind: output, shape index: {}]
  %s10 = sld [smem:[#allocation0]]
  $region69: #{tpu_custom_call.1} parent=0
    _
  %s12 = ssub.s32 1, %s10
  %s13 = scalar_select 0, %s12, %s10
  $region1: #{tpu_custom_call.1} parent=0
    #allocation3 [shape = 'u8[8192]{0}', space=vmem, size = 0x2000, scoped, tag = 'output window, operand 0']
    #allocation4 [shape = 's32[2]{0}', space=sflag, size = 0x8, scoped, tag = 'scoped memory for tpu_custom_call.1']
    %14 = vsyncpa [#allocation4], 0
    %s15 = scalar_lea.sflag [#allocation4], 1
    %16 = vsyncpa %s15, 0
    loop: start=0, step=1, limit=4
    $region2: #{tpu_custom_call.1} parent=1 // loop_pre_header
      _
    $region3: #{tpu_custom_call.1} parent=1 // loop_header
      %s18 = sphi 0, %s22
      %p19 = scmp.ge.s32.totalorder %s18, 4
      %s28 = sphi 0, %s30
      %s31 = sphi 0, %s28
      %s32 = sphi 0, %s31
      %s48 = sphi 0, %s32
      %s52 = sphi 0, %s52
      %s54 = sphi 0, %s52
      %s55 = sphi 0, %s54
      %s69 = sphi 0, %s55
      %s73 = sphi 0, %s73
      %s75 = sphi 0, %s73
      %s76 = sphi 0, %s75
      %s90 = sphi 0, %s76
      %s94 = sphi 0, %s94
      %s96 = sphi 0, %s94
      %s97 = sphi 0, %s96
      %s111 = sphi 0, %s97
      %s115 = sphi 0, %s115
      %s117 = sphi 0, %s115
      %s118 = sphi 0, %s117
      %s132 = sphi 0, %s118
      %s136 = sphi 0, %s136
      %s138 = sphi 0, %s136
      %s139 = sphi 0, %s138
      %s153 = sphi 0, %s139
      %s157 = sphi 0, %s157
      %s159 = sphi 0, %s157
      %s160 = sphi 0, %s159
      %s174 = sphi 0, %s160
      %s178 = sphi 0, %s178
      %s180 = sphi 0, %s178
      %s181 = sphi 0, %s180
      %s195 = sphi 0, %s181
      %s199 = sphi 0, %s199
      %s201 = sphi 0, %s199
      %s202 = sphi 0, %s201
      %s216 = sphi 0, %s202
      %s222 = sphi 0, %s224
      %s225 = sphi 0, %s222
      %s226 = sphi 0, %s225
      %s242 = sphi 0, %s226
    $region4: #{tpu_custom_call.1} parent=1 // loop_header_branch
      %21 = sbr.rel (%p19) target = $region8
    $region5: #{tpu_custom_call.1} parent=1 // loop_body
      %s23 = ssub.s32 %s18, 1
      %s24 = ssub.s32 %s18, 2
      %s25 = sadd.s32 %s18, 1
      %s26 = ssub.s32 %s18, %s25
      %p27 = scmp.eq.s32.totalorder %s26, 0
      %s29 = sadd.s32 %s28, 1
      %s30 = scalar_select %p27, %s28, %s29
      %p33 = pneg %p27
      %p34 = scmp.eq.s32.totalorder %s18, 1
      %p35 = por %p33, %p34
      %p36 = scmp.ne.s32.totalorder %s28, %s31
      %p37 = scmp.eq.s32.totalorder %s18, 0
      %p38 = por %p36, %p37
      %p39 = scmp.ne.s32.totalorder %s28, %s31
      %p40 = scmp.eq.s32.totalorder %s23, 1
      %p41 = por %p39, %p40
      %p42 = scmp.ne.s32.totalorder %s31, %s32
      %p43 = scmp.eq.s32.totalorder %s23, 0
      %p44 = por %p42, %p43
      %p45 = scmp.ne.s32.totalorder %s31, %s32
      %p46 = scmp.eq.s32.totalorder %s24, 1
      %p47 = por %p45, %p46
      %p49 = scmp.ne.s32.totalorder %s32, %s48
      %p50 = scmp.eq.s32.totalorder %s24, 0
      %p51 = por %p49, %p50
      %s53 = sadd.s32 %s52, 1
      %p56 = scmp.eq.s32.totalorder %s18, 1
      %p57 = scmp.ne.s32.totalorder %s52, %s54
      %p58 = scmp.eq.s32.totalorder %s18, 0
      %p59 = por %p57, %p58
      %p60 = scmp.ne.s32.totalorder %s52, %s54
      %p61 = scmp.eq.s32.totalorder %s23, 1
      %p62 = por %p60, %p61
      %p63 = scmp.ne.s32.totalorder %s54, %s55
      %p64 = scmp.eq.s32.totalorder %s23, 0
      %p65 = por %p63, %p64
      %p66 = scmp.ne.s32.totalorder %s54, %s55
      %p67 = scmp.eq.s32.totalorder %s24, 1
      %p68 = por %p66, %p67
      %p70 = scmp.ne.s32.totalorder %s55, %s69
      %p71 = scmp.eq.s32.totalorder %s24, 0
      %p72 = por %p70, %p71
      %s74 = sadd.s32 %s73, 1
      %p77 = scmp.eq.s32.totalorder %s18, 1
      %p78 = scmp.ne.s32.totalorder %s73, %s75
      %p79 = scmp.eq.s32.totalorder %s18, 0
      %p80 = por %p78, %p79
      %p81 = scmp.ne.s32.totalorder %s73, %s75
      %p82 = scmp.eq.s32.totalorder %s23, 1
      %p83 = por %p81, %p82
      %p84 = scmp.ne.s32.totalorder %s75, %s76
      %p85 = scmp.eq.s32.totalorder %s23, 0
      %p86 = por %p84, %p85
      %p87 = scmp.ne.s32.totalorder %s75, %s76
      %p88 = scmp.eq.s32.totalorder %s24, 1
      %p89 = por %p87, %p88
      %p91 = scmp.ne.s32.totalorder %s76, %s90
      %p92 = scmp.eq.s32.totalorder %s24, 0
      %p93 = por %p91, %p92
      %s95 = sadd.s32 %s94, 1
      %p98 = scmp.eq.s32.totalorder %s18, 1
      %p99 = scmp.ne.s32.totalorder %s94, %s96
      %p100 = scmp.eq.s32.totalorder %s18, 0
      %p101 = por %p99, %p100
      %p102 = scmp.ne.s32.totalorder %s94, %s96
      %p103 = scmp.eq.s32.totalorder %s23, 1
      %p104 = por %p102, %p103
      %p105 = scmp.ne.s32.totalorder %s96, %s97
      %p106 = scmp.eq.s32.totalorder %s23, 0
      %p107 = por %p105, %p106
      %p108 = scmp.ne.s32.totalorder %s96, %s97
      %p109 = scmp.eq.s32.totalorder %s24, 1
      %p110 = por %p108, %p109
      %p112 = scmp.ne.s32.totalorder %s97, %s111
      %p113 = scmp.eq.s32.totalorder %s24, 0
      %p114 = por %p112, %p113
      %s116 = sadd.s32 %s115, 1
      %p119 = scmp.eq.s32.totalorder %s18, 1
      %p120 = scmp.ne.s32.totalorder %s115, %s117
      %p121 = scmp.eq.s32.totalorder %s18, 0
      %p122 = por %p120, %p121
      %p123 = scmp.ne.s32.totalorder %s115, %s117
      %p124 = scmp.eq.s32.totalorder %s23, 1
      %p125 = por %p123, %p124
      %p126 = scmp.ne.s32.totalorder %s117, %s118
      %p127 = scmp.eq.s32.totalorder %s23, 0
      %p128 = por %p126, %p127
      %p129 = scmp.ne.s32.totalorder %s117, %s118
      %p130 = scmp.eq.s32.totalorder %s24, 1
      %p131 = por %p129, %p130
      %p133 = scmp.ne.s32.totalorder %s118, %s132
      %p134 = scmp.eq.s32.totalorder %s24, 0
      %p135 = por %p133, %p134
      %s137 = sadd.s32 %s136, 1
      %p140 = scmp.eq.s32.totalorder %s18, 1
      %p141 = scmp.ne.s32.totalorder %s136, %s138
      %p142 = scmp.eq.s32.totalorder %s18, 0
      %p143 = por %p141, %p142
      %p144 = scmp.ne.s32.totalorder %s136, %s138
      %p145 = scmp.eq.s32.totalorder %s23, 1
      %p146 = por %p144, %p145
      %p147 = scmp.ne.s32.totalorder %s138, %s139
      %p148 = scmp.eq.s32.totalorder %s23, 0
      %p149 = por %p147, %p148
      %p150 = scmp.ne.s32.totalorder %s138, %s139
      %p151 = scmp.eq.s32.totalorder %s24, 1
      %p152 = por %p150, %p151
      %p154 = scmp.ne.s32.totalorder %s139, %s153
      %p155 = scmp.eq.s32.totalorder %s24, 0
      %p156 = por %p154, %p155
      %s158 = sadd.s32 %s157, 1
      %p161 = scmp.eq.s32.totalorder %s18, 1
      %p162 = scmp.ne.s32.totalorder %s157, %s159
      %p163 = scmp.eq.s32.totalorder %s18, 0
      %p164 = por %p162, %p163
      %p165 = scmp.ne.s32.totalorder %s157, %s159
      %p166 = scmp.eq.s32.totalorder %s23, 1
      %p167 = por %p165, %p166
      %p168 = scmp.ne.s32.totalorder %s159, %s160
      %p169 = scmp.eq.s32.totalorder %s23, 0
      %p170 = por %p168, %p169
      %p171 = scmp.ne.s32.totalorder %s159, %s160
      %p172 = scmp.eq.s32.totalorder %s24, 1
      %p173 = por %p171, %p172
      %p175 = scmp.ne.s32.totalorder %s160, %s174
      %p176 = scmp.eq.s32.totalorder %s24, 0
      %p177 = por %p175, %p176
      %s179 = sadd.s32 %s178, 1
      %p182 = scmp.eq.s32.totalorder %s18, 1
      %p183 = scmp.ne.s32.totalorder %s178, %s180
      %p184 = scmp.eq.s32.totalorder %s18, 0
      %p185 = por %p183, %p184
      %p186 = scmp.ne.s32.totalorder %s178, %s180
      %p187 = scmp.eq.s32.totalorder %s23, 1
      %p188 = por %p186, %p187
      %p189 = scmp.ne.s32.totalorder %s180, %s181
      %p190 = scmp.eq.s32.totalorder %s23, 0
      %p191 = por %p189, %p190
      %p192 = scmp.ne.s32.totalorder %s180, %s181
      %p193 = scmp.eq.s32.totalorder %s24, 1
      %p194 = por %p192, %p193
      %p196 = scmp.ne.s32.totalorder %s181, %s195
      %p197 = scmp.eq.s32.totalorder %s24, 0
      %p198 = por %p196, %p197
      %s200 = sadd.s32 %s199, 1
      %p203 = scmp.eq.s32.totalorder %s18, 1
      %p204 = scmp.ne.s32.totalorder %s199, %s201
      %p205 = scmp.eq.s32.totalorder %s18, 0
      %p206 = por %p204, %p205
      %p207 = scmp.ne.s32.totalorder %s199, %s201
      %p208 = scmp.eq.s32.totalorder %s23, 1
      %p209 = por %p207, %p208
      %p210 = scmp.ne.s32.totalorder %s201, %s202
      %p211 = scmp.eq.s32.totalorder %s23, 0
      %p212 = por %p210, %p211
      %p213 = scmp.ne.s32.totalorder %s201, %s202
      %p214 = scmp.eq.s32.totalorder %s24, 1
      %p215 = por %p213, %p214
      %p217 = scmp.ne.s32.totalorder %s202, %s216
      %p218 = scmp.eq.s32.totalorder %s24, 0
      %p219 = por %p217, %p218
      %s220 = ssub.s32 %s18, %s25
      %p221 = scmp.eq.s32.totalorder %s220, 0
      %s223 = sadd.s32 %s222, 1
      %s224 = scalar_select %p221, %s222, %s223
      %p227 = pneg %p221
      %p228 = scmp.eq.s32.totalorder %s18, 1
      %p229 = por %p227, %p228
      %p230 = scmp.ne.s32.totalorder %s222, %s225
      %p231 = scmp.eq.s32.totalorder %s18, 0
      %p232 = por %p230, %p231
      %p233 = scmp.ne.s32.totalorder %s222, %s225
      %p234 = scmp.eq.s32.totalorder %s23, 1
      %p235 = por %p233, %p234
      %p236 = scmp.ne.s32.totalorder %s225, %s226
      %p237 = scmp.eq.s32.totalorder %s23, 0
      %p238 = por %p236, %p237
      %p239 = scmp.ne.s32.totalorder %s225, %s226
      %p240 = scmp.eq.s32.totalorder %s24, 1
      %p241 = por %p239, %p240
      %p243 = scmp.ne.s32.totalorder %s226, %s242
      %p244 = scmp.eq.s32.totalorder %s24, 0
      %p245 = por %p243, %p244
      %p246 = scmp.le.s32.totalorder 1, %s18
      %p247 = scmp.lt.s32.totalorder %s18, 3
      %p248 = pnand %p246, %p247
      %p249 = pneg %p248
      // Predicated region
      $region9: #{tpu_custom_call.1} parent=5 // pred_check
        _
      $region10: #{tpu_custom_call.1} parent=5 // pred_check_branch
        %251 = sbr.rel (%p248) target = $region12
      $region11: #{tpu_custom_call.1} parent=5 // pred_region
        %s252 = ssub.s32 %s18, 1
        // Predicated region
        $region13: #{tpu_custom_call.1} parent=11 // pred_check
          %p253 = pneg %p65
        $region14: #{tpu_custom_call.1} parent=11 // pred_check_branch
          %255 = sbr.rel (%p253) target = $region16
        $region15: #{tpu_custom_call.1} parent=11 // pred_region
          _
        $region16: #{tpu_custom_call.1} parent=11 // pred_fallthru
          _
        // Predicated region
        $region17: #{tpu_custom_call.1} parent=11 // pred_check
          %p256 = pneg %p86
        $region18: #{tpu_custom_call.1} parent=11 // pred_check_branch
          %258 = sbr.rel (%p256) target = $region20
        $region19: #{tpu_custom_call.1} parent=11 // pred_region
          _
        $region20: #{tpu_custom_call.1} parent=11 // pred_fallthru
          _
        // Predicated region
        $region21: #{tpu_custom_call.1} parent=11 // pred_check
          %p259 = pneg %p107
        $region22: #{tpu_custom_call.1} parent=11 // pred_check_branch
          %261 = sbr.rel (%p259) target = $region24
        $region23: #{tpu_custom_call.1} parent=11 // pred_region
          _
        $region24: #{tpu_custom_call.1} parent=11 // pred_fallthru
          _
        // Predicated region
        $region25: #{tpu_custom_call.1} parent=11 // pred_check
          %p262 = pneg %p128
        $region26: #{tpu_custom_call.1} parent=11 // pred_check_branch
          %264 = sbr.rel (%p262) target = $region28
        $region27: #{tpu_custom_call.1} parent=11 // pred_region
          _
        $region28: #{tpu_custom_call.1} parent=11 // pred_fallthru
          _
        // Predicated region
        $region29: #{tpu_custom_call.1} parent=11 // pred_check
          %p265 = pneg %p149
        $region30: #{tpu_custom_call.1} parent=11 // pred_check_branch
          %267 = sbr.rel (%p265) target = $region32
        $region31: #{tpu_custom_call.1} parent=11 // pred_region
          _
        $region32: #{tpu_custom_call.1} parent=11 // pred_fallthru
          _
        // Predicated region
        $region33: #{tpu_custom_call.1} parent=11 // pred_check
          %p268 = pneg %p170
        $region34: #{tpu_custom_call.1} parent=11 // pred_check_branch
          %270 = sbr.rel (%p268) target = $region36
        $region35: #{tpu_custom_call.1} parent=11 // pred_region
          _
        $region36: #{tpu_custom_call.1} parent=11 // pred_fallthru
          _
        // Predicated region
        $region37: #{tpu_custom_call.1} parent=11 // pred_check
          %p271 = pneg %p191
        $region38: #{tpu_custom_call.1} parent=11 // pred_check_branch
          %273 = sbr.rel (%p271) target = $region40
        $region39: #{tpu_custom_call.1} parent=11 // pred_region
          _
        $region40: #{tpu_custom_call.1} parent=11 // pred_fallthru
          _
        // Predicated region
        $region41: #{tpu_custom_call.1} parent=11 // pred_check
          %p274 = pneg %p212
        $region42: #{tpu_custom_call.1} parent=11 // pred_check_branch
          %276 = sbr.rel (%p274) target = $region44
        $region43: #{tpu_custom_call.1} parent=11 // pred_region
          _
        $region44: #{tpu_custom_call.1} parent=11 // pred_fallthru
          _
      $region12: #{tpu_custom_call.1} parent=5 // pred_fallthru
        _
      %p277 = scmp.lt.s32.totalorder %s18, 2
      // Predicated region
      $region45: #{tpu_custom_call.1} parent=5 // pred_check
        %p278 = pneg %p277
      $region46: #{tpu_custom_call.1} parent=5 // pred_check_branch
        %280 = sbr.rel (%p278) target = $region48
      $region47: #{tpu_custom_call.1} parent=5 // pred_region
        // Predicated region
        $region49: #{tpu_custom_call.1} parent=47 // pred_check
          %p281 = pneg %p38
        $region50: #{tpu_custom_call.1} parent=47 // pred_check_branch
          %283 = sbr.rel (%p281) target = $region52
        $region51: #{tpu_custom_call.1} parent=47 // pred_region
          %p284 = scmp.lt.s32.totalorder %s18, 1
          %s285 = scalar_select %p284, %s18, 1
          %s286 = smul.addr %s285, 2
          %s287 = smul.addr %s286, 4
          %s288 = scalar_lea.vmem %s0, %s287
        $region52: #{tpu_custom_call.1} parent=47 // pred_fallthru
          _
      $region48: #{tpu_custom_call.1} parent=5 // pred_fallthru
        _
      %p289 = scmp.le.s32.totalorder 1, %s18
      %p290 = scmp.lt.s32.totalorder %s18, 3
      %p291 = pnand %p289, %p290
      %p292 = pneg %p291
      // Predicated region
      $region53: #{tpu_custom_call.1} parent=5 // pred_check
        _
      $region54: #{tpu_custom_call.1} parent=5 // pred_check_branch
        %294 = sbr.rel (%p291) target = $region56
      $region55: #{tpu_custom_call.1} parent=5 // pred_region
        %s295 = ssub.s32 %s18, 1
        %p296 = scmp.lt.s32.totalorder %s23, 1
        %s297 = scalar_select %p296, %s23, 1
        %s298 = smul.addr %s297, 2
        %s299 = smul.addr %s298, 4
        %s300 = scalar_lea.vmem %s0, %s299
        %p301 = pneg %p44
        %p302 = pneg %p41
        %p303 = pneg %p65
        %p304 = pneg %p62
        %p305 = pneg %p86
        %p306 = pneg %p83
        %p307 = pneg %p107
        %p308 = pneg %p104
        %p309 = pneg %p128
        %p310 = pneg %p125
        %p311 = pneg %p149
        %p312 = pneg %p146
        %p313 = pneg %p170
        %p314 = pneg %p167
        %p315 = pneg %p191
        %p316 = pneg %p188
        %p317 = pneg %p212
        %p318 = pneg %p209
        %p319 = pneg %p238
        %p320 = pneg %p235
        %s321 = sand.u32 %s225, 1
        %s322 = scalar_lea.sflag [#allocation4], %s321
        %s323 = sand.u32 %s225, 1
        %s324 = smul.addr %s323, 8
        %s325 = scalar_lea.vmem [#allocation3], %s324
        %p326 = scmp.lt.s32.totalorder %s23, 1
        %s327 = scalar_select %p326, %s23, 1
        %s328 = smul.addr %s327, 2
        %s329 = smul.addr %s328, 4
        %s330 = scalar_lea.vmem %s0, %s329
        %v332 = vld [vmem:[%s330] sm:$0xf]
        %v333 = vld [vmem:[%s330 + $0x4] sm:$0xf]
        %v334 = vld [vmem:[%s1] sm:$0xf]
        %v335 = vld [vmem:[%s1 + $0x4] sm:$0xf]
        %v336 = vld [vmem:[%s1 + $0x8] sm:$0xf]
        %v337 = vld [vmem:[%s1 + $0xc] sm:$0xf]
        %v338 = vld [vmem:[%s2] sm:$0xff]
        %v339 = vld [vmem:[%s2 + $0x8] sm:$0xff]
        %v340 = vld [vmem:[%s2 + $0x10] sm:$0xff]
        %v341 = vld [vmem:[%s2 + $0x18] sm:$0xff]
        %343 = vset.pattern.permute.xlu0 0
        %344 = vperm.xlu0 %343, %v338
        %v345 = vpop.permute.xlu0 %344
        %348 = vset.pattern.permute.xlu0 0
        %349 = vperm.xlu0 %348, %v339
        %v350 = vpop.permute.xlu0 %349
        %353 = vset.pattern.permute.xlu0 0
        %354 = vperm.xlu0 %353, %v340
        %v355 = vpop.permute.xlu0 %354
        %358 = vset.pattern.permute.xlu0 0
        %359 = vperm.xlu0 %358, %v341
        %v360 = vpop.permute.xlu0 %359
        %v366 = vunpack.c.l.b16 %v334
        %v367 = vunpack.c.l.b16 %v335
        %v368 = vunpack.c.l.b16 %v336
        %v369 = vunpack.c.l.b16 %v337
        %v370 = vpack.c.b16 %v367, %v366
        %v371 = vpack.c.b16 %v369, %v368
        %v374 = vunpack.c.l.b16 %v332
        %v375 = vunpack.c.l.b16 %v333
        %v376 = vpack.c.b16 %v375, %v374
        %vm378 = vcmask 130048
        %v380 = vsel %vm378, %v370, 0
        %v383 = vsel %vm378, %v371, 0
        %385 = vmatpush.bf16.msra.mxu0 0
        %386 = vmatpush.bf16.msra.mxu0 0
        %387 = vmatpush.bf16.msra.mxu0 0
        %388 = vmatpush.bf16.msra.mxu0 0
        %389 = vmatpush.bf16.msra.mxu0 0
        %390 = vmatpush.bf16.msra.mxu0 0
        %391 = vmatpush.bf16.msra.mxu0 0
        %392 = vmatpush.bf16.msra.mxu0 %v376
        %393 = vmatmul.bf16.gmra.mxu0 %v380
        %v394 = vpop.f32.mrf.mxu0
        %v395 = vadd.f32 %v345, %v394
        %v396 = vpop.f32.mrf.mxu0
        %v397 = vadd.f32 %v350, %v396
        %398 = vmatmul.bf16.gmra.mxu0 %v383
        %v399 = vpop.f32.mrf.mxu0
        %v400 = vadd.f32 %v355, %v399
        %v401 = vpop.f32.mrf.mxu0
        %v402 = vadd.f32 %v360, %v401
        %403 = vdwg.mxu0
        %404 = vrot.lane.b32.xlu0 %v395, 1
        %v405 = vpop.permute.xlu0 %404
        %406 = vrot.lane.b32.xlu0 %v397, 1
        %v407 = vpop.permute.xlu0 %406
        %408 = vrot.lane.b32.xlu0 %v400, 1
        %v409 = vpop.permute.xlu0 %408
        %410 = vrot.lane.b32.xlu0 %v402, 1
        %v411 = vpop.permute.xlu0 %410
        %v412 = vpack.c.bf16 %v405, %v405
        %v413 = vpack.c.bf16 %v407, %v407
        %v414 = vpack.c.bf16 %v409, %v409
        %v415 = vpack.c.bf16 %v411, %v411
        %416 = vst [vmem:[#allocation2] sm:$0xf] %v412
        %417 = vst [vmem:[#allocation2 + $0x4] sm:$0xf] %v413
        %418 = vst [vmem:[#allocation2 + $0x8] sm:$0xf] %v414
        %419 = vst [vmem:[#allocation2 + $0xc] sm:$0xf] %v415
        %vm420 = vcmask 3072
        %421 = vst.msk [vmem:[#allocation2] sm:$0xf] %vm420, 0
        %422 = vst.msk [vmem:[#allocation2 + $0x4] sm:$0xf] %vm420, 0
        %423 = vst.msk [vmem:[#allocation2 + $0x8] sm:$0xf] %vm420, 0
        %424 = vst.msk [vmem:[#allocation2 + $0xc] sm:$0xf] %vm420, 0
        %v425 = vpack.c.bf16 %v395, %v395
        %v426 = vpack.c.bf16 %v397, %v397
        %v427 = vpack.c.bf16 %v400, %v400
        %v428 = vpack.c.bf16 %v402, %v402
        %429 = vst [vmem:[#allocation2 + $0x10] sm:$0xf] %v425
        %430 = vst [vmem:[#allocation2 + $0x14] sm:$0xf] %v426
        %431 = vst [vmem:[#allocation2 + $0x18] sm:$0xf] %v427
        %432 = vst [vmem:[#allocation2 + $0x1c] sm:$0xf] %v428
        %433 = vrot.lane.b32.xlu0 %v395, 127
        %v434 = vpop.permute.xlu0 %433
        %435 = vrot.lane.b32.xlu0 %v397, 127
        %v436 = vpop.permute.xlu0 %435
        %437 = vrot.lane.b32.xlu0 %v400, 127
        %v438 = vpop.permute.xlu0 %437
        %439 = vrot.lane.b32.xlu0 %v402, 127
        %v440 = vpop.permute.xlu0 %439
        %v441 = vpack.c.bf16 %v434, %v434
        %v442 = vpack.c.bf16 %v436, %v436
        %v443 = vpack.c.bf16 %v438, %v438
        %v444 = vpack.c.bf16 %v440, %v440
        %445 = vst [vmem:[#allocation2 + $0x20] sm:$0xf] %v441
        %446 = vst [vmem:[#allocation2 + $0x24] sm:$0xf] %v442
        %447 = vst [vmem:[#allocation2 + $0x28] sm:$0xf] %v443
        %448 = vst [vmem:[#allocation2 + $0x2c] sm:$0xf] %v444
        %vm449 = vcmask 1044472
        %450 = vst.msk [vmem:[#allocation2 + $0x20] sm:$0xf] %vm449, 0
        %451 = vst.msk [vmem:[#allocation2 + $0x24] sm:$0xf] %vm449, 0
        %452 = vst.msk [vmem:[#allocation2 + $0x28] sm:$0xf] %vm449, 0
        %453 = vst.msk [vmem:[#allocation2 + $0x2c] sm:$0xf] %vm449, 0
        %v454 = vld [vmem:[%s3] sm:$0xf]
        %v455 = vld [vmem:[%s3 + $0x4] sm:$0xf]
        %v456 = vld [vmem:[%s3 + $0x8] sm:$0xf]
        %v457 = vld [vmem:[%s3 + $0xc] sm:$0xf]
        %v458 = vld [vmem:[#allocation2] sm:$0xf]
        %v459 = vld [vmem:[#allocation2 + $0x4] sm:$0xf]
        %v460 = vld [vmem:[#allocation2 + $0x8] sm:$0xf]
        %v461 = vld [vmem:[#allocation2 + $0xc] sm:$0xf]
        %v462 = vld [vmem:[#allocation2 + $0x10] sm:$0xf]
        %v463 = vld [vmem:[#allocation2 + $0x14] sm:$0xf]
        %v464 = vld [vmem:[#allocation2 + $0x18] sm:$0xf]
        %v465 = vld [vmem:[#allocation2 + $0x1c] sm:$0xf]
        %v466 = vld [vmem:[#allocation2 + $0x20] sm:$0xf]
        %v467 = vld [vmem:[#allocation2 + $0x24] sm:$0xf]
        %v468 = vld [vmem:[#allocation2 + $0x28] sm:$0xf]
        %v469 = vld [vmem:[#allocation2 + $0x2c] sm:$0xf]
        %v470 = vld [vmem:[%s4] sm:$0xff]
        %v471 = vld [vmem:[%s4 + $0x8] sm:$0xff]
        %v472 = vld [vmem:[%s4 + $0x10] sm:$0xff]
        %v473 = vld [vmem:[%s4 + $0x18] sm:$0xff]
        %475 = vset.pattern.permute.xlu0 0
        %476 = vperm.xlu0 %475, %v470
        %v477 = vpop.permute.xlu0 %476
        %480 = vset.pattern.permute.xlu0 0
        %481 = vperm.xlu0 %480, %v471
        %v482 = vpop.permute.xlu0 %481
        %485 = vset.pattern.permute.xlu0 0
        %486 = vperm.xlu0 %485, %v472
        %v487 = vpop.permute.xlu0 %486
        %490 = vset.pattern.permute.xlu0 0
        %491 = vperm.xlu0 %490, %v473
        %v492 = vpop.permute.xlu0 %491
        %v498 = vunpack.c.l.b16 %v454
        %v499 = vunpack.c.l.b16 %v455
        %v500 = vunpack.c.l.b16 %v456
        %v501 = vunpack.c.l.b16 %v457
        %v502 = vpack.c.b16 %v499, %v498
        %v503 = vpack.c.b16 %v501, %v500
        %v516 = vunpack.c.l.b16 %v458
        %v517 = vunpack.c.l.b16 %v459
        %v518 = vunpack.c.l.b16 %v460
        %v519 = vunpack.c.l.b16 %v461
        %v520 = vunpack.c.l.b16 %v462
        %v521 = vunpack.c.l.b16 %v463
        %v522 = vunpack.c.l.b16 %v464
        %v523 = vunpack.c.l.b16 %v465
        %v524 = vunpack.c.l.b16 %v466
        %v525 = vunpack.c.l.b16 %v467
        %v526 = vunpack.c.l.b16 %v468
        %v527 = vunpack.c.l.b16 %v469
        %v528 = vpack.c.b16 %v517, %v516
        %v529 = vpack.c.b16 %v519, %v518
        %v530 = vpack.c.b16 %v521, %v520
        %v531 = vpack.c.b16 %v523, %v522
        %v532 = vpack.c.b16 %v525, %v524
        %v533 = vpack.c.b16 %v527, %v526
        %vm540 = vcmask 785408
        %v542 = vsel %vm540, %v502, 0
        %v545 = vsel %vm540, %v503, 0
        %547 = vmatpush.bf16.msra.mxu0 0
        %548 = vmatpush.bf16.msra.mxu0 0
        %549 = vmatpush.bf16.msra.mxu0 %v533
        %550 = vmatpush.bf16.msra.mxu0 %v532
        %551 = vmatpush.bf16.msra.mxu0 %v531
        %552 = vmatpush.bf16.msra.mxu0 %v530
        %553 = vmatpush.bf16.msra.mxu0 %v529
        %554 = vmatpush.bf16.msra.mxu0 %v528
        %555 = vmatmul.bf16.gmra.mxu0 %v542
        %v556 = vpop.f32.mrf.mxu0
        %v557 = vadd.f32 %v477, %v556
        %v558 = vpop.f32.mrf.mxu0
        %v559 = vadd.f32 %v482, %v558
        %560 = vmatmul.bf16.gmra.mxu0 %v545
        %v561 = vpop.f32.mrf.mxu0
        %v562 = vadd.f32 %v487, %v561
        %v563 = vpop.f32.mrf.mxu0
        %v564 = vadd.f32 %v492, %v563
        %565 = vdwg.mxu0
        %v566 = vmax.f32 %v557, 0.0
        %v567 = vmax.f32 %v559, 0.0
        %v568 = vmax.f32 %v562, 0.0
        %v569 = vmax.f32 %v564, 0.0
        %v570 = vld [vmem:[%s5] sm:$0xf]
        %v571 = vld [vmem:[%s5 + $0x4] sm:$0xf]
        %v572 = vld [vmem:[%s5 + $0x8] sm:$0xf]
        %v573 = vld [vmem:[%s5 + $0xc] sm:$0xf]
        %v574 = vpack.c.bf16 %v567, %v566
        %v575 = vpack.c.bf16 %v569, %v568
        %v576 = vld [vmem:[%s6] sm:$0xff]
        %v577 = vld [vmem:[%s6 + $0x8] sm:$0xff]
        %v578 = vld [vmem:[%s6 + $0x10] sm:$0xff]
        %v579 = vld [vmem:[%s6 + $0x18] sm:$0xff]
        %581 = vset.pattern.permute.xlu0 0
        %582 = vperm.xlu0 %581, %v576
        %v583 = vpop.permute.xlu0 %582
        %586 = vset.pattern.permute.xlu0 0
        %587 = vperm.xlu0 %586, %v577
        %v588 = vpop.permute.xlu0 %587
        %591 = vset.pattern.permute.xlu0 0
        %592 = vperm.xlu0 %591, %v578
        %v593 = vpop.permute.xlu0 %592
        %596 = vset.pattern.permute.xlu0 0
        %597 = vperm.xlu0 %596, %v579
        %v598 = vpop.permute.xlu0 %597
        %v604 = vunpack.c.l.b16 %v570
        %v605 = vunpack.c.l.b16 %v571
        %v606 = vunpack.c.l.b16 %v572
        %v607 = vunpack.c.l.b16 %v573
        %v608 = vpack.c.b16 %v605, %v604
        %v609 = vpack.c.b16 %v607, %v606
        %vm610 = vcmask 261120
        %v612 = vsel %vm610, %v608, 0
        %v615 = vsel %vm610, %v609, 0
        %617 = vmatpush.bf16.msra.mxu0 0
        %618 = vmatpush.bf16.msra.mxu0 0
        %619 = vmatpush.bf16.msra.mxu0 0
        %620 = vmatpush.bf16.msra.mxu0 0
        %621 = vmatpush.bf16.msra.mxu0 0
        %622 = vmatpush.bf16.msra.mxu0 0
        %623 = vmatpush.bf16.msra.mxu0 %v575
        %624 = vmatpush.bf16.msra.mxu0 %v574
        %625 = vmatmul.bf16.gmra.mxu0 %v612
        %v626 = vpop.f32.mrf.mxu0
        %v627 = vadd.f32 %v583, %v626
        %v628 = vpop.f32.mrf.mxu0
        %v629 = vadd.f32 %v588, %v628
        %630 = vmatmul.bf16.gmra.mxu0 %v615
        %v631 = vpop.f32.mrf.mxu0
        %v632 = vadd.f32 %v593, %v631
        %v633 = vpop.f32.mrf.mxu0
        %v634 = vadd.f32 %v598, %v633
        %635 = vdwg.mxu0
        %v636 = vadd.f32 %v395, %v627
        %v637 = vadd.f32 %v397, %v629
        %v638 = vadd.f32 %v400, %v632
        %v639 = vadd.f32 %v402, %v634
        %640 = vrot.lane.b32.xlu0 %v636, 2
        %v641 = vpop.permute.xlu0 %640
        %642 = vrot.lane.b32.xlu0 %v637, 2
        %v643 = vpop.permute.xlu0 %642
        %644 = vrot.lane.b32.xlu0 %v638, 2
        %v645 = vpop.permute.xlu0 %644
        %646 = vrot.lane.b32.xlu0 %v639, 2
        %v647 = vpop.permute.xlu0 %646
        %v648 = vpack.c.bf16 %v641, %v641
        %v649 = vpack.c.bf16 %v643, %v643
        %v650 = vpack.c.bf16 %v645, %v645
        %v651 = vpack.c.bf16 %v647, %v647
        %652 = vst [vmem:[#allocation2] sm:$0xf] %v648
        %653 = vst [vmem:[#allocation2 + $0x4] sm:$0xf] %v649
        %654 = vst [vmem:[#allocation2 + $0x8] sm:$0xf] %v650
        %655 = vst [vmem:[#allocation2 + $0xc] sm:$0xf] %v651
        %vm656 = vcmask 11264
        %657 = vst.msk [vmem:[#allocation2] sm:$0xf] %vm656, 0
        %658 = vst.msk [vmem:[#allocation2 + $0x4] sm:$0xf] %vm656, 0
        %659 = vst.msk [vmem:[#allocation2 + $0x8] sm:$0xf] %vm656, 0
        %660 = vst.msk [vmem:[#allocation2 + $0xc] sm:$0xf] %vm656, 0
        %v661 = vpack.c.bf16 %v636, %v636
        %v662 = vpack.c.bf16 %v637, %v637
        %v663 = vpack.c.bf16 %v638, %v638
        %v664 = vpack.c.bf16 %v639, %v639
        %665 = vst [vmem:[#allocation2 + $0x10] sm:$0xf] %v661
        %666 = vst [vmem:[#allocation2 + $0x14] sm:$0xf] %v662
        %667 = vst [vmem:[#allocation2 + $0x18] sm:$0xf] %v663
        %668 = vst [vmem:[#allocation2 + $0x1c] sm:$0xf] %v664
        %669 = vrot.lane.b32.xlu0 %v636, 126
        %v670 = vpop.permute.xlu0 %669
        %671 = vrot.lane.b32.xlu0 %v637, 126
        %v672 = vpop.permute.xlu0 %671
        %673 = vrot.lane.b32.xlu0 %v638, 126
        %v674 = vpop.permute.xlu0 %673
        %675 = vrot.lane.b32.xlu0 %v639, 126
        %v676 = vpop.permute.xlu0 %675
        %v677 = vpack.c.bf16 %v670, %v670
        %v678 = vpack.c.bf16 %v672, %v672
        %v679 = vpack.c.bf16 %v674, %v674
        %v680 = vpack.c.bf16 %v676, %v676
        %681 = vst [vmem:[#allocation2 + $0x20] sm:$0xf] %v677
        %682 = vst [vmem:[#allocation2 + $0x24] sm:$0xf] %v678
        %683 = vst [vmem:[#allocation2 + $0x28] sm:$0xf] %v679
        %684 = vst [vmem:[#allocation2 + $0x2c] sm:$0xf] %v680
        %vm685 = vcmask 1044464
        %686 = vst.msk [vmem:[#allocation2 + $0x20] sm:$0xf] %vm685, 0
        %687 = vst.msk [vmem:[#allocation2 + $0x24] sm:$0xf] %vm685, 0
        %688 = vst.msk [vmem:[#allocation2 + $0x28] sm:$0xf] %vm685, 0
        %689 = vst.msk [vmem:[#allocation2 + $0x2c] sm:$0xf] %vm685, 0
        %s690 = scalar_lea.vmem %s3, 16
        %v691 = vld [vmem:[%s690] sm:$0xf]
        %v692 = vld [vmem:[%s690 + $0x4] sm:$0xf]
        %v693 = vld [vmem:[%s690 + $0x8] sm:$0xf]
        %v694 = vld [vmem:[%s690 + $0xc] sm:$0xf]
        %v695 = vld [vmem:[#allocation2] sm:$0xf]
        %v696 = vld [vmem:[#allocation2 + $0x4] sm:$0xf]
        %v697 = vld [vmem:[#allocation2 + $0x8] sm:$0xf]
        %v698 = vld [vmem:[#allocation2 + $0xc] sm:$0xf]
        %v699 = vld [vmem:[#allocation2 + $0x10] sm:$0xf]
        %v700 = vld [vmem:[#allocation2 + $0x14] sm:$0xf]
        %v701 = vld [vmem:[#allocation2 + $0x18] sm:$0xf]
        %v702 = vld [vmem:[#allocation2 + $0x1c] sm:$0xf]
        %v703 = vld [vmem:[#allocation2 + $0x20] sm:$0xf]
        %v704 = vld [vmem:[#allocation2 + $0x24] sm:$0xf]
        %v705 = vld [vmem:[#allocation2 + $0x28] sm:$0xf]
        %v706 = vld [vmem:[#allocation2 + $0x2c] sm:$0xf]
        %s707 = scalar_lea.vmem %s4, 32
        %v708 = vld [vmem:[%s707] sm:$0xff]
        %v709 = vld [vmem:[%s707 + $0x8] sm:$0xff]
        %v710 = vld [vmem:[%s707 + $0x10] sm:$0xff]
        %v711 = vld [vmem:[%s707 + $0x18] sm:$0xff]
        %713 = vset.pattern.permute.xlu0 0
        %714 = vperm.xlu0 %713, %v708
        %v715 = vpop.permute.xlu0 %714
        %718 = vset.pattern.permute.xlu0 0
        %719 = vperm.xlu0 %718, %v709
        %v720 = vpop.permute.xlu0 %719
        %723 = vset.pattern.permute.xlu0 0
        %724 = vperm.xlu0 %723, %v710
        %v725 = vpop.permute.xlu0 %724
        %728 = vset.pattern.permute.xlu0 0
        %729 = vperm.xlu0 %728, %v711
        %v730 = vpop.permute.xlu0 %729
        %v736 = vunpack.c.l.b16 %v691
        %v737 = vunpack.c.l.b16 %v692
        %v738 = vunpack.c.l.b16 %v693
        %v739 = vunpack.c.l.b16 %v694
        %v740 = vpack.c.b16 %v737, %v736
        %v741 = vpack.c.b16 %v739, %v738
        %v754 = vunpack.c.l.b16 %v695
        %v755 = vunpack.c.l.b16 %v696
        %v756 = vunpack.c.l.b16 %v697
        %v757 = vunpack.c.l.b16 %v698
        %v758 = vunpack.c.l.b16 %v699
        %v759 = vunpack.c.l.b16 %v700
        %v760 = vunpack.c.l.b16 %v701
        %v761 = vunpack.c.l.b16 %v702
        %v762 = vunpack.c.l.b16 %v703
        %v763 = vunpack.c.l.b16 %v704
        %v764 = vunpack.c.l.b16 %v705
        %v765 = vunpack.c.l.b16 %v706
        %v766 = vpack.c.b16 %v755, %v754
        %v767 = vpack.c.b16 %v757, %v756
        %v768 = vpack.c.b16 %v759, %v758
        %v769 = vpack.c.b16 %v761, %v760
        %v770 = vpack.c.b16 %v763, %v762
        %v771 = vpack.c.b16 %v765, %v764
        %v779 = vsel %vm540, %v740, 0
        %v782 = vsel %vm540, %v741, 0
        %784 = vmatpush.bf16.msra.mxu0 0
        %785 = vmatpush.bf16.msra.mxu0 0
        %786 = vmatpush.bf16.msra.mxu0 %v771
        %787 = vmatpush.bf16.msra.mxu0 %v770
        %788 = vmatpush.bf16.msra.mxu0 %v769
        %789 = vmatpush.bf16.msra.mxu0 %v768
        %790 = vmatpush.bf16.msra.mxu0 %v767
        %791 = vmatpush.bf16.msra.mxu0 %v766
        %792 = vmatmul.bf16.gmra.mxu0 %v779
        %v793 = vpop.f32.mrf.mxu0
        %v794 = vadd.f32 %v715, %v793
        %v795 = vpop.f32.mrf.mxu0
        %v796 = vadd.f32 %v720, %v795
        %797 = vmatmul.bf16.gmra.mxu0 %v782
        %v798 = vpop.f32.mrf.mxu0
        %v799 = vadd.f32 %v725, %v798
        %v800 = vpop.f32.mrf.mxu0
        %v801 = vadd.f32 %v730, %v800
        %802 = vdwg.mxu0
        %v803 = vmax.f32 %v794, 0.0
        %v804 = vmax.f32 %v796, 0.0
        %v805 = vmax.f32 %v799, 0.0
        %v806 = vmax.f32 %v801, 0.0
        %s807 = scalar_lea.vmem %s5, 16
        %v808 = vld [vmem:[%s807] sm:$0xf]
        %v809 = vld [vmem:[%s807 + $0x4] sm:$0xf]
        %v810 = vld [vmem:[%s807 + $0x8] sm:$0xf]
        %v811 = vld [vmem:[%s807 + $0xc] sm:$0xf]
        %v812 = vpack.c.bf16 %v804, %v803
        %v813 = vpack.c.bf16 %v806, %v805
        %s814 = scalar_lea.vmem %s6, 32
        %v815 = vld [vmem:[%s814] sm:$0xff]
        %v816 = vld [vmem:[%s814 + $0x8] sm:$0xff]
        %v817 = vld [vmem:[%s814 + $0x10] sm:$0xff]
        %v818 = vld [vmem:[%s814 + $0x18] sm:$0xff]
        %820 = vset.pattern.permute.xlu0 0
        %821 = vperm.xlu0 %820, %v815
        %v822 = vpop.permute.xlu0 %821
        %825 = vset.pattern.permute.xlu0 0
        %826 = vperm.xlu0 %825, %v816
        %v827 = vpop.permute.xlu0 %826
        %830 = vset.pattern.permute.xlu0 0
        %831 = vperm.xlu0 %830, %v817
        %v832 = vpop.permute.xlu0 %831
        %835 = vset.pattern.permute.xlu0 0
        %836 = vperm.xlu0 %835, %v818
        %v837 = vpop.permute.xlu0 %836
        %v843 = vunpack.c.l.b16 %v808
        %v844 = vunpack.c.l.b16 %v809
        %v845 = vunpack.c.l.b16 %v810
        %v846 = vunpack.c.l.b16 %v811
        %v847 = vpack.c.b16 %v844, %v843
        %v848 = vpack.c.b16 %v846, %v845
        %v850 = vsel %vm610, %v847, 0
        %v853 = vsel %vm610, %v848, 0
        %855 = vmatpush.bf16.msra.mxu0 0
        %856 = vmatpush.bf16.msra.mxu0 0
        %857 = vmatpush.bf16.msra.mxu0 0
        %858 = vmatpush.bf16.msra.mxu0 0
        %859 = vmatpush.bf16.msra.mxu0 0
        %860 = vmatpush.bf16.msra.mxu0 0
        %861 = vmatpush.bf16.msra.mxu0 %v813
        %862 = vmatpush.bf16.msra.mxu0 %v812
        %863 = vmatmul.bf16.gmra.mxu0 %v850
        %v864 = vpop.f32.mrf.mxu0
        %v865 = vadd.f32 %v822, %v864
        %v866 = vpop.f32.mrf.mxu0
        %v867 = vadd.f32 %v827, %v866
        %868 = vmatmul.bf16.gmra.mxu0 %v853
        %v869 = vpop.f32.mrf.mxu0
        %v870 = vadd.f32 %v832, %v869
        %v871 = vpop.f32.mrf.mxu0
        %v872 = vadd.f32 %v837, %v871
        %873 = vdwg.mxu0
        %v874 = vadd.f32 %v636, %v865
        %v875 = vadd.f32 %v637, %v867
        %v876 = vadd.f32 %v638, %v870
        %v877 = vadd.f32 %v639, %v872
        %878 = vrot.lane.b32.xlu0 %v874, 4
        %v879 = vpop.permute.xlu0 %878
        %880 = vrot.lane.b32.xlu0 %v875, 4
        %v881 = vpop.permute.xlu0 %880
        %882 = vrot.lane.b32.xlu0 %v876, 4
        %v883 = vpop.permute.xlu0 %882
        %884 = vrot.lane.b32.xlu0 %v877, 4
        %v885 = vpop.permute.xlu0 %884
        %v886 = vpack.c.bf16 %v879, %v879
        %v887 = vpack.c.bf16 %v881, %v881
        %v888 = vpack.c.bf16 %v883, %v883
        %v889 = vpack.c.bf16 %v885, %v885
        %890 = vst [vmem:[#allocation2] sm:$0xf] %v886
        %891 = vst [vmem:[#allocation2 + $0x4] sm:$0xf] %v887
        %892 = vst [vmem:[#allocation2 + $0x8] sm:$0xf] %v888
        %893 = vst [vmem:[#allocation2 + $0xc] sm:$0xf] %v889
        %vm894 = vcmask 27648
        %895 = vst.msk [vmem:[#allocation2] sm:$0xf] %vm894, 0
        %896 = vst.msk [vmem:[#allocation2 + $0x4] sm:$0xf] %vm894, 0
        %897 = vst.msk [vmem:[#allocation2 + $0x8] sm:$0xf] %vm894, 0
        %898 = vst.msk [vmem:[#allocation2 + $0xc] sm:$0xf] %vm894, 0
        %v899 = vpack.c.bf16 %v874, %v874
        %v900 = vpack.c.bf16 %v875, %v875
        %v901 = vpack.c.bf16 %v876, %v876
        %v902 = vpack.c.bf16 %v877, %v877
        %903 = vst [vmem:[#allocation2 + $0x10] sm:$0xf] %v899
        %904 = vst [vmem:[#allocation2 + $0x14] sm:$0xf] %v900
        %905 = vst [vmem:[#allocation2 + $0x18] sm:$0xf] %v901
        %906 = vst [vmem:[#allocation2 + $0x1c] sm:$0xf] %v902
        %907 = vrot.lane.b32.xlu0 %v874, 124
        %v908 = vpop.permute.xlu0 %907
        %909 = vrot.lane.b32.xlu0 %v875, 124
        %v910 = vpop.permute.xlu0 %909
        %911 = vrot.lane.b32.xlu0 %v876, 124
        %v912 = vpop.permute.xlu0 %911
        %913 = vrot.lane.b32.xlu0 %v877, 124
        %v914 = vpop.permute.xlu0 %913
        %v915 = vpack.c.bf16 %v908, %v908
        %v916 = vpack.c.bf16 %v910, %v910
        %v917 = vpack.c.bf16 %v912, %v912
        %v918 = vpack.c.bf16 %v914, %v914
        %919 = vst [vmem:[#allocation2 + $0x20] sm:$0xf] %v915
        %920 = vst [vmem:[#allocation2 + $0x24] sm:$0xf] %v916
        %921 = vst [vmem:[#allocation2 + $0x28] sm:$0xf] %v917
        %922 = vst [vmem:[#allocation2 + $0x2c] sm:$0xf] %v918
        %vm923 = vcmask 1044448
        %924 = vst.msk [vmem:[#allocation2 + $0x20] sm:$0xf] %vm923, 0
        %925 = vst.msk [vmem:[#allocation2 + $0x24] sm:$0xf] %vm923, 0
        %926 = vst.msk [vmem:[#allocation2 + $0x28] sm:$0xf] %vm923, 0
        %927 = vst.msk [vmem:[#allocation2 + $0x2c] sm:$0xf] %vm923, 0
        %s928 = scalar_lea.vmem %s3, 32
        %v929 = vld [vmem:[%s928] sm:$0xf]
        %v930 = vld [vmem:[%s928 + $0x4] sm:$0xf]
        %v931 = vld [vmem:[%s928 + $0x8] sm:$0xf]
        %v932 = vld [vmem:[%s928 + $0xc] sm:$0xf]
        %v933 = vld [vmem:[#allocation2] sm:$0xf]
        %v934 = vld [vmem:[#allocation2 + $0x4] sm:$0xf]
        %v935 = vld [vmem:[#allocation2 + $0x8] sm:$0xf]
        %v936 = vld [vmem:[#allocation2 + $0xc] sm:$0xf]
        %v937 = vld [vmem:[#allocation2 + $0x10] sm:$0xf]
        %v938 = vld [vmem:[#allocation2 + $0x14] sm:$0xf]
        %v939 = vld [vmem:[#allocation2 + $0x18] sm:$0xf]
        %v940 = vld [vmem:[#allocation2 + $0x1c] sm:$0xf]
        %v941 = vld [vmem:[#allocation2 + $0x20] sm:$0xf]
        %v942 = vld [vmem:[#allocation2 + $0x24] sm:$0xf]
        %v943 = vld [vmem:[#allocation2 + $0x28] sm:$0xf]
        %v944 = vld [vmem:[#allocation2 + $0x2c] sm:$0xf]
        %s945 = scalar_lea.vmem %s4, 64
        %v946 = vld [vmem:[%s945] sm:$0xff]
        %v947 = vld [vmem:[%s945 + $0x8] sm:$0xff]
        %v948 = vld [vmem:[%s945 + $0x10] sm:$0xff]
        %v949 = vld [vmem:[%s945 + $0x18] sm:$0xff]
        %951 = vset.pattern.permute.xlu0 0
        %952 = vperm.xlu0 %951, %v946
        %v953 = vpop.permute.xlu0 %952
        %956 = vset.pattern.permute.xlu0 0
        %957 = vperm.xlu0 %956, %v947
        %v958 = vpop.permute.xlu0 %957
        %961 = vset.pattern.permute.xlu0 0
        %962 = vperm.xlu0 %961, %v948
        %v963 = vpop.permute.xlu0 %962
        %966 = vset.pattern.permute.xlu0 0
        %967 = vperm.xlu0 %966, %v949
        %v968 = vpop.permute.xlu0 %967
        %v974 = vunpack.c.l.b16 %v929
        %v975 = vunpack.c.l.b16 %v930
        %v976 = vunpack.c.l.b16 %v931
        %v977 = vunpack.c.l.b16 %v932
        %v978 = vpack.c.b16 %v975, %v974
        %v979 = vpack.c.b16 %v977, %v976
        %v992 = vunpack.c.l.b16 %v933
        %v993 = vunpack.c.l.b16 %v934
        %v994 = vunpack.c.l.b16 %v935
        %v995 = vunpack.c.l.b16 %v936
        %v996 = vunpack.c.l.b16 %v937
        %v997 = vunpack.c.l.b16 %v938
        %v998 = vunpack.c.l.b16 %v939
        %v999 = vunpack.c.l.b16 %v940
        %v1000 = vunpack.c.l.b16 %v941
        %v1001 = vunpack.c.l.b16 %v942
        %v1002 = vunpack.c.l.b16 %v943
        %v1003 = vunpack.c.l.b16 %v944
        %v1004 = vpack.c.b16 %v993, %v992
        %v1005 = vpack.c.b16 %v995, %v994
        %v1006 = vpack.c.b16 %v997, %v996
        %v1007 = vpack.c.b16 %v999, %v998
        %v1008 = vpack.c.b16 %v1001, %v1000
        %v1009 = vpack.c.b16 %v1003, %v1002
        %v1017 = vsel %vm540, %v978, 0
        %v1020 = vsel %vm540, %v979, 0
        %1022 = vmatpush.bf16.msra.mxu0 0
        %1023 = vmatpush.bf16.msra.mxu0 0
        %1024 = vmatpush.bf16.msra.mxu0 %v1009
        %1025 = vmatpush.bf16.msra.mxu0 %v1008
        %1026 = vmatpush.bf16.msra.mxu0 %v1007
        %1027 = vmatpush.bf16.msra.mxu0 %v1006
        %1028 = vmatpush.bf16.msra.mxu0 %v1005
        %1029 = vmatpush.bf16.msra.mxu0 %v1004
        %1030 = vmatmul.bf16.gmra.mxu0 %v1017
        %v1031 = vpop.f32.mrf.mxu0
        %v1032 = vadd.f32 %v953, %v1031
        %v1033 = vpop.f32.mrf.mxu0
        %v1034 = vadd.f32 %v958, %v1033
        %1035 = vmatmul.bf16.gmra.mxu0 %v1020
        %v1036 = vpop.f32.mrf.mxu0
        %v1037 = vadd.f32 %v963, %v1036
        %v1038 = vpop.f32.mrf.mxu0
        %v1039 = vadd.f32 %v968, %v1038
        %1040 = vdwg.mxu0
        %v1041 = vmax.f32 %v1032, 0.0
        %v1042 = vmax.f32 %v1034, 0.0
        %v1043 = vmax.f32 %v1037, 0.0
        %v1044 = vmax.f32 %v1039, 0.0
        %s1045 = scalar_lea.vmem %s5, 32
        %v1046 = vld [vmem:[%s1045] sm:$0xf]
        %v1047 = vld [vmem:[%s1045 + $0x4] sm:$0xf]
        %v1048 = vld [vmem:[%s1045 + $0x8] sm:$0xf]
        %v1049 = vld [vmem:[%s1045 + $0xc] sm:$0xf]
        %v1050 = vpack.c.bf16 %v1042, %v1041
        %v1051 = vpack.c.bf16 %v1044, %v1043
        %s1052 = scalar_lea.vmem %s6, 64
        %v1053 = vld [vmem:[%s1052] sm:$0xff]
        %v1054 = vld [vmem:[%s1052 + $0x8] sm:$0xff]
        %v1055 = vld [vmem:[%s1052 + $0x10] sm:$0xff]
        %v1056 = vld [vmem:[%s1052 + $0x18] sm:$0xff]
        %1058 = vset.pattern.permute.xlu0 0
        %1059 = vperm.xlu0 %1058, %v1053
        %v1060 = vpop.permute.xlu0 %1059
        %1063 = vset.pattern.permute.xlu0 0
        %1064 = vperm.xlu0 %1063, %v1054
        %v1065 = vpop.permute.xlu0 %1064
        %1068 = vset.pattern.permute.xlu0 0
        %1069 = vperm.xlu0 %1068, %v1055
        %v1070 = vpop.permute.xlu0 %1069
        %1073 = vset.pattern.permute.xlu0 0
        %1074 = vperm.xlu0 %1073, %v1056
        %v1075 = vpop.permute.xlu0 %1074
        %v1081 = vunpack.c.l.b16 %v1046
        %v1082 = vunpack.c.l.b16 %v1047
        %v1083 = vunpack.c.l.b16 %v1048
        %v1084 = vunpack.c.l.b16 %v1049
        %v1085 = vpack.c.b16 %v1082, %v1081
        %v1086 = vpack.c.b16 %v1084, %v1083
        %v1088 = vsel %vm610, %v1085, 0
        %v1091 = vsel %vm610, %v1086, 0
        %1093 = vmatpush.bf16.msra.mxu0 0
        %1094 = vmatpush.bf16.msra.mxu0 0
        %1095 = vmatpush.bf16.msra.mxu0 0
        %1096 = vmatpush.bf16.msra.mxu0 0
        %1097 = vmatpush.bf16.msra.mxu0 0
        %1098 = vmatpush.bf16.msra.mxu0 0
        %1099 = vmatpush.bf16.msra.mxu0 %v1051
        %1100 = vmatpush.bf16.msra.mxu0 %v1050
        %1101 = vmatmul.bf16.gmra.mxu0 %v1088
        %v1102 = vpop.f32.mrf.mxu0
        %v1103 = vadd.f32 %v1060, %v1102
        %v1104 = vpop.f32.mrf.mxu0
        %v1105 = vadd.f32 %v1065, %v1104
        %1106 = vmatmul.bf16.gmra.mxu0 %v1091
        %v1107 = vpop.f32.mrf.mxu0
        %v1108 = vadd.f32 %v1070, %v1107
        %v1109 = vpop.f32.mrf.mxu0
        %v1110 = vadd.f32 %v1075, %v1109
        %1111 = vdwg.mxu0
        %v1112 = vadd.f32 %v874, %v1103
        %v1113 = vadd.f32 %v875, %v1105
        %v1114 = vadd.f32 %v876, %v1108
        %v1115 = vadd.f32 %v877, %v1110
        %v1116 = vld [vmem:[%s7] sm:$0xf]
        %v1117 = vpack.c.bf16 %v1113, %v1112
        %v1118 = vpack.c.bf16 %v1115, %v1114
        %v1119 = vld [vmem:[%s8] sm:$0xff]
        %1121 = vset.pattern.permute.xlu0 0
        %1122 = vperm.xlu0 %1121, %v1119
        %v1123 = vpop.permute.xlu0 %1122
        %v1126 = vsel %vm610, %v1116, 0
        %1128 = vmatpush.bf16.msra.mxu0 0
        %1129 = vmatpush.bf16.msra.mxu0 0
        %1130 = vmatpush.bf16.msra.mxu0 0
        %1131 = vmatpush.bf16.msra.mxu0 0
        %1132 = vmatpush.bf16.msra.mxu0 0
        %1133 = vmatpush.bf16.msra.mxu0 0
        %1134 = vmatpush.bf16.msra.mxu0 %v1118
        %1135 = vmatpush.bf16.msra.mxu0 %v1117
        %1136 = vmatmul.bf16.gmra.mxu0 %v1126
        %v1137 = vpop.f32.mrf.mxu0
        %v1138 = vadd.f32 %v1123, %v1137
        %v1139 = vpop.f32.mrf.mxu0
        %1140 = vdwg.mxu0
        %1141 = vst [vmem:[%s325] sm:$0xff] %v1138
        %s1142 = sand.u32 %s225, 1
        %s1143 = scalar_lea.sflag [#allocation4], %s1142
        %s1144 = sand.u32 %s225, 1
        %s1145 = smul.addr %s1144, 8
        %s1146 = scalar_lea.vmem [#allocation3], %s1145
        // Predicated region
        $region57: #{tpu_custom_call.1} parent=55 // pred_check
          %p1147 = pneg %p235
        $region58: #{tpu_custom_call.1} parent=55 // pred_check_branch
          %1149 = sbr.rel (%p1147) target = $region60
        $region59: #{tpu_custom_call.1} parent=55 // pred_region
          %1151 = vsyncadd %s1143, 0
          %s1152 = smul.addr %s23, 8
          %s1153 = scalar_lea.hbm %s9, %s1152
          %s1155 = sshll.u32 %s1146, 4
          %s1156 = int_to_ptr.vmem [resolvable:$true] %s1155
          %s1157 = sshll.u32 %s1153, 4
          %s1158 = int_to_ptr.hbm [resolvable:$true] %s1157
          %1160 = dma.vmem_to_hbm [thread:$0]  %s1156, 128, %s1158, %s1143
        $region60: #{tpu_custom_call.1} parent=55 // pred_fallthru
          _
      $region56: #{tpu_custom_call.1} parent=5 // pred_fallthru
        _
      %p1161 = scmp.le.s32.totalorder 2, %s18
      // Predicated region
      $region61: #{tpu_custom_call.1} parent=5 // pred_check
        %p1162 = pneg %p1161
      $region62: #{tpu_custom_call.1} parent=5 // pred_check_branch
        %1164 = sbr.rel (%p1162) target = $region64
      $region63: #{tpu_custom_call.1} parent=5 // pred_region
        %s1165 = ssub.s32 %s18, 2
        // Predicated region
        $region65: #{tpu_custom_call.1} parent=63 // pred_check
          %p1166 = pneg %p241
        $region66: #{tpu_custom_call.1} parent=63 // pred_check_branch
          %1168 = sbr.rel (%p1166) target = $region68
        $region67: #{tpu_custom_call.1} parent=63 // pred_region
          %s1169 = sand.u32 %s226, 1
          %s1170 = scalar_lea.sflag [#allocation4], %s1169
          %s1171 = sand.u32 %s226, 1
          %s1172 = smul.addr %s1171, 8
          %s1173 = scalar_lea.vmem [#allocation3], %s1172
          %1175 = dma.done %s1170, 128
        $region68: #{tpu_custom_call.1} parent=63 // pred_fallthru
          _
      $region64: #{tpu_custom_call.1} parent=5 // pred_fallthru
        _
    $region6: #{tpu_custom_call.1} parent=1 // loop_footer
      %s22 = sadd.s32 1, %s18
    $region7: #{tpu_custom_call.1} parent=1 // loop_footer_branch
      %17 = sbr.rel target = $region3
    $region8: #{tpu_custom_call.1} parent=1 // loop_exit
      _
    %1176 = vsyncpa [#allocation4], 1
    %s1177 = scalar_lea.sflag [#allocation4], 1
    %1178 = vsyncpa %s1177, 1

</llo_original>
